<compile_context>
chip_gen: v7x
topology: tpu7x:2x2x1
jax: 0.10.0
libtpu: 0.0.40
codegen_flags: <defaults>
</compile_context>

<pallas_src>
import functools

import jax
import jax.numpy as jnp
from jax.experimental import pallas as pl
from jax.experimental.pallas import tpu as pltpu

_LANE = 128


# ------------------------------ Pallas kernel ------------------------------

def _make_memory_block_kernel(num_resblock, num_memblock):
    """Fused MemoryBlock kernel for a fixed (R, M) configuration.

    Ref order: x(CR,tp), y_0..y_{M-1}(CR,tp),
               vecs(NV,CR,1), rbw(2R,CR,CR), gw(S,CR,CR), o(CR,tp)
    vecs layout: per resblock r : 6r + [s1, b1, cb1, s2, b2, cb2]
                 per gate slab s: 6R + 2s + [scale, bias]
                 gate conv bias : 6R + 2S
    """
    R, M = num_resblock, num_memblock
    S = R + M

    def kernel(*refs):
        x_ref = refs[0]
        y_refs = refs[1:1 + M]
        vecs_ref = refs[1 + M]          # (NV, CR, 1)
        rbw_ref = refs[2 + M]           # (2R, CR, CR)
        gw_ref = refs[3 + M]            # (S, CR, CR)
        o_ref = refs[4 + M]             # (CR, tp)

        def vec(k):
            return vecs_ref[k]          # (CR, 1), lane-broadcast on use

        def bn_lrelu(h, ks, kb):
            # eval-mode BatchNorm affine + LeakyReLU(0.01) as mul+max
            h = h * vec(ks) + vec(kb)
            return jnp.maximum(h, 0.01 * h)

        def mix(w, h):
            # (CR, K) @ (K, tp): VPU broadcast-FMAs for tiny K, MXU for big K.
            if w.shape[1] >= 32:
                return jnp.dot(w, h, preferred_element_type=jnp.float32)
            acc = w[:, 0:1] * h[0:1, :]
            for k in range(1, w.shape[1]):
                acc = acc + w[:, k:k + 1] * h[k:k + 1, :]
            return acc

        # --- recursive unit with the gate accumulation fused in ------------
        h = x_ref[...]                  # (CR, tp) f32
        acc = None
        for r in range(R):
            base = 6 * r
            t = mix(rbw_ref[2 * r], bn_lrelu(h, base + 0, base + 1)) + vec(base + 2)
            t = mix(rbw_ref[2 * r + 1], bn_lrelu(t, base + 3, base + 4)) + vec(base + 5)
            h = t + h                   # residual add; h == x_r
            gb = 6 * R + 2 * r          # fused gate contribution of slab r
            term = mix(gw_ref[r], bn_lrelu(h, gb, gb + 1))
            acc = term if acc is None else acc + term

        # --- remaining gate slabs from the memory inputs ys ----------------
        for m in range(M):
            s = R + m
            gb = 6 * R + 2 * s
            term = mix(gw_ref[s], bn_lrelu(y_refs[m][...], gb, gb + 1))
            acc = term if acc is None else acc + term

        o_ref[...] = acc + vec(6 * R + 2 * S)

    return kernel


# --------------------------- parameter construction ------------------------

def _bn_affine(c):
    """Eval-mode BatchNorm2d with PyTorch default init (gamma=1, beta=0,
    mean=0, var=1, eps=1e-5) -> per-channel scale/bias, shape (C,)."""
    eps = 1e-5
    scale = jnp.full((c,), (1.0 + eps) ** -0.5, dtype=jnp.float32)
    bias = jnp.zeros((c,), dtype=jnp.float32)
    return scale, bias


def _conv1x1_params(key, cin, cout):
    """1x1 conv: weight (Cout, Cin), bias (Cout,).  PyTorch default init bound."""
    kw, kb = jax.random.split(key)
    bound = 1.0 / (cin ** 0.5)
    w = jax.random.uniform(kw, (cout, cin), jnp.float32, -bound, bound)
    b = jax.random.uniform(kb, (cout,), jnp.float32, -bound, bound)
    return w, b


def make_memory_block_params(key, channels, num_resblock, num_memblock):
    keys = jax.random.split(key, 2 * num_resblock + 1)
    resblocks = []
    for r in range(num_resblock):
        s1, b1 = _bn_affine(channels)
        w1, cb1 = _conv1x1_params(keys[2 * r], channels, channels)
        s2, b2 = _bn_affine(channels)
        w2, cb2 = _conv1x1_params(keys[2 * r + 1], channels, channels)
        resblocks.append(dict(s1=s1, b1=b1, w1=w1, cb1=cb1,
                              s2=s2, b2=b2, w2=w2, cb2=cb2))
    gate_cin = (num_resblock + num_memblock) * channels
    gs, gb = _bn_affine(gate_cin)
    gw, gcb = _conv1x1_params(keys[-1], gate_cin, channels)
    return dict(resblocks=resblocks, gate=dict(s=gs, b=gb, w=gw, cb=gcb))


def _pack_kernel_params(params, channels, pack):
    """Expand params to the packed (C*pack)-row layout and consolidate into
    3 stacked arrays (3 DMAs instead of ~26 tiny ones)."""
    g = params["gate"]
    S = g["w"].shape[1] // channels
    CR = channels * pack
    eye = jnp.eye(pack, dtype=jnp.float32)

    def rep(v):                         # (K,) -> (K*pack, 1)
        return jnp.repeat(v, pack)[:, None]

    vecs, rbw = [], []
    for rb in params["resblocks"]:
        vecs += [rep(rb["s1"]), rep(rb["b1"]), rep(rb["cb1"]),
                 rep(rb["s2"]), rep(rb["b2"]), rep(rb["cb2"])]
        rbw += [jnp.kron(rb["w1"], eye), jnp.kron(rb["w2"], eye)]
    for s in range(S):
        vecs += [rep(g["s"][s * channels:(s + 1) * channels]),
                 rep(g["b"][s * channels:(s + 1) * channels])]
    vecs.append(rep(g["cb"]))

    gw_exp = jnp.kron(g["w"], eye)                                  # (CR, S*CR)
    gw = jnp.stack([gw_exp[:, s * CR:(s + 1) * CR] for s in range(S)], axis=0)

    vecs = jnp.stack(vecs, axis=0)                                  # (NV, CR, 1)
    rbw = (jnp.stack(rbw, axis=0) if rbw
           else jnp.zeros((1, CR, CR), jnp.float32))                # (2R, CR, CR)
    return vecs, rbw, gw


# ------------------------------- forward pass ------------------------------

def _choose_pack(channels, hw):
    """Smallest pixel-pack factor that fills f32 sublanes (C*pack % 8 == 0)."""
    for p in (1, 2, 4, 8):
        if (channels * p) % 8 == 0 and hw % p == 0:
            return p
    for p in (8, 4, 2):
        if hw % p == 0 and channels * p <= 8:
            return p
    return 1


def _choose_pixel_tile(hwp, cr, n_streams, nbatch, budget_bytes=8 << 20):
    """Largest 128-lane-multiple divisor of hwp whose double-buffered activation
    footprint fits the VMEM budget; prefer >=4 total grid steps (>=2 per v7x TC)."""
    max_by_budget = max(_LANE, budget_bytes // (2 * n_streams * cr * 4))
    divs = [t for t in range(_LANE, hwp + 1, _LANE)
            if hwp % t == 0 and t <= max_by_budget]
    if not divs:
        return hwp
    pref = [t for t in divs if nbatch * (hwp // t) >= 4]
    return max(pref) if pref else max(divs)


def memory_block_forward(params, x_nchw, ys_nchw):
    """x: (N, C, H, W). ys: list of (N, C, H, W). Returns (gate_out, new_ys)."""
    nb, c, hh, ww = x_nchw.shape
    R = len(params["resblocks"])
    M = len(ys_nchw)
    HW = hh * ww

    pack = _choose_pack(c, HW)
    CR = c * pack
    HW2 = HW // pack

    # Free row-major views (no HBM transpose): (N,C,H,W) -> (N, C*pack, HW/pack)
    xp = x_nchw.reshape(nb, CR, HW2)
    yps = [y.reshape(nb, CR, HW2) for y in ys_nchw]

    HWp = -(-HW2 // _LANE) * _LANE
    if HWp != HW2:
        padspec = ((0, 0), (0, 0), (0, HWp - HW2))
        xp = jnp.pad(xp, padspec)
        yps = [jnp.pad(y, padspec) for y in yps]

    tpix = _choose_pixel_tile(HWp, CR, n_streams=M + 2, nbatch=nb)
    grid = (nb, HWp // tpix)

    vecs, rbw, gw = _pack_kernel_params(params, c, pack)

    tile_spec = pl.BlockSpec((None, CR, tpix), lambda b, t: (b, 0, t))

    def full_spec(arr):
        zeros = (0,) * arr.ndim
        return pl.BlockSpec(arr.shape, lambda b, t, _z=zeros: _z)

    args = [xp] + yps + [vecs, rbw, gw]
    in_specs = ([tile_spec] * (M + 1)
                + [full_spec(vecs), full_spec(rbw), full_spec(gw)])

    out_p = pl.pallas_call(
        _make_memory_block_kernel(R, M),
        out_shape=jax.ShapeDtypeStruct((nb, CR, HWp), jnp.float32),
        grid=grid,
        in_specs=in_specs,
        out_specs=pl.BlockSpec((None, CR, tpix), lambda b, t: (b, 0, t)),
        compiler_params=pltpu.CompilerParams(
            dimension_semantics=("parallel", "parallel"),
            vmem_limit_bytes=32 * 1024 * 1024),
    )(*args)

    if HWp != HW2:
        out_p = out_p[:, :, :HW2]
    gate_out = out_p.reshape(nb, c, hh, ww)        # free view back to NCHW
    new_ys = list(ys_nchw) + [gate_out]
    return gate_out, new_ys


# --------------------------- pure-JAX reference -----------------------------

def memory_block_reference(params, x_nchw, ys_nchw):
    def bn_lrelu(a, s, b):
        a = a * s[None, :, None, None] + b[None, :, None, None]
        return jnp.where(a >= 0.0, a, 0.01 * a)

    def conv1x1(wm, cb, a):            # FMA decomposition, matches kernel order
        acc = None
        for ci in range(wm.shape[1]):
            t = wm[:, ci][None, :, None, None] * a[:, ci][:, None, :, :]
            acc = t if acc is None else acc + t
        return acc + cb[None, :, None, None]

    h = x_nchw
    xs = []
    for rb in params["resblocks"]:
        res = h
        t = conv1x1(rb["w1"], rb["cb1"], bn_lrelu(h, rb["s1"], rb["b1"]))
        t = conv1x1(rb["w2"], rb["cb2"], bn_lrelu(t, rb["s2"], rb["b2"]))
        h = t + res
        xs.append(h)
    g = params["gate"]
    cat = jnp.concatenate(xs + list(ys_nchw), axis=1)
    return conv1x1(g["w"], g["cb"], bn_lrelu(cat, g["s"], g["b"]))


# ----------------------------------- main -----------------------------------

if __name__ == "__main__":
    # MemoryBlock(channels=4, num_resblock=2, num_memblock=1, ...)
    N, C, H, W = 2, 4, 16, 16
    NUM_RESBLOCK, NUM_MEMBLOCK = 2, 1

    key = jax.random.PRNGKey(0)
    k_params, k_x, k_y = jax.random.split(key, 3)

    params = make_memory_block_params(k_params, C, NUM_RESBLOCK, NUM_MEMBLOCK)

    x = jax.random.normal(k_x, (N, C, H, W), jnp.float32)
    # ys: list of previous memory-block outputs (num_memblock entries)
    ys = [jax.random.normal(k_y, (N, C, H, W), jnp.float32)]

    fwd = jax.jit(functools.partial(memory_block_forward, params))
    gate_out, new_ys = fwd(x, ys)
    gate_out = jax.block_until_ready(gate_out)

    assert gate_out.shape == (N, C, H, W)
    assert len(new_ys) == NUM_MEMBLOCK + 1

    ref = memory_block_reference(params, x, ys)
    max_err = float(jnp.max(jnp.abs(gate_out - ref)))
    assert max_err < 1e-4, f"max abs error vs reference: {max_err}"

    print("KERNEL_OK")
</pallas_src>

<mosaic_0001>
module attributes {stable_mosaic.version = 11 : i64} {
  func.func @kernel(%arg0: i32, %arg1: i32, %arg2: memref<1x8x128xf32, #tpu.memory_space<vmem>>, %arg3: memref<1x8x128xf32, #tpu.memory_space<vmem>>, %arg4: memref<19x8x1xf32, #tpu.memory_space<vmem>>, %arg5: memref<4x8x8xf32, #tpu.memory_space<vmem>>, %arg6: memref<3x8x8xf32, #tpu.memory_space<vmem>>, %arg7: memref<1x8x128xf32, #tpu.memory_space<vmem>>) attributes {dimension_semantics = [#tpu.dimension_semantics<parallel>, #tpu.dimension_semantics<parallel>], iteration_bounds = array<i64: 2, 1>, scalar_prefetch = 0 : i64, scratch_operands = 0 : i64, tpu.core_type = #tpu.core_type<tc>, window_params = [{transform_indices = @transform_0, window_bounds = array<i64: 1, 8, 128>}, {transform_indices = @transform_1, window_bounds = array<i64: 1, 8, 128>}, {pipeline_mode = #tpu.pipeline_mode<synchronous>, transform_indices = @transform_2, window_bounds = array<i64: 19, 8, 1>}, {pipeline_mode = #tpu.pipeline_mode<synchronous>, transform_indices = @transform_3, window_bounds = array<i64: 4, 8, 8>}, {pipeline_mode = #tpu.pipeline_mode<synchronous>, transform_indices = @transform_4, window_bounds = array<i64: 3, 8, 8>}, {transform_indices = @transform_5, window_bounds = array<i64: 1, 8, 128>}]} {
    %c0 = arith.constant 0 : index
    %c0_0 = arith.constant 0 : index
    %c0_1 = arith.constant 0 : index
    %0 = vector.load %arg2[%c0, %c0_0, %c0_1] : memref<1x8x128xf32, #tpu.memory_space<vmem>>, vector<1x8x128xf32>
    %1 = vector.shape_cast %0 : vector<1x8x128xf32> to vector<8x128xf32>
    %c0_2 = arith.constant 0 : index
    %c0_3 = arith.constant 0 : index
    %c0_4 = arith.constant 0 : index
    %2 = vector.load %arg5[%c0_2, %c0_3, %c0_4] : memref<4x8x8xf32, #tpu.memory_space<vmem>>, vector<1x8x8xf32>
    %3 = vector.shape_cast %2 : vector<1x8x8xf32> to vector<8x8xf32>
    %c0_5 = arith.constant 0 : index
    %c0_6 = arith.constant 0 : index
    %c0_7 = arith.constant 0 : index
    %4 = vector.load %arg4[%c0_5, %c0_6, %c0_7] : memref<19x8x1xf32, #tpu.memory_space<vmem>>, vector<1x8x1xf32>
    %5 = vector.shape_cast %4 : vector<1x8x1xf32> to vector<8x1xf32>
    %6 = vector.broadcast %5 : vector<8x1xf32> to vector<8x128xf32>
    %7 = arith.mulf %1, %6 : vector<8x128xf32>
    %c1 = arith.constant 1 : index
    %c0_8 = arith.constant 0 : index
    %c0_9 = arith.constant 0 : index
    %8 = vector.load %arg4[%c1, %c0_8, %c0_9] : memref<19x8x1xf32, #tpu.memory_space<vmem>>, vector<1x8x1xf32>
    %9 = vector.shape_cast %8 : vector<1x8x1xf32> to vector<8x1xf32>
    %10 = vector.broadcast %9 : vector<8x1xf32> to vector<8x128xf32>
    %11 = arith.addf %7, %10 : vector<8x128xf32>
    %cst = arith.constant 0.00999999977 : f32
    %12 = vector.broadcast %cst : f32 to vector<8x128xf32>
    %13 = arith.mulf %12, %11 : vector<8x128xf32>
    %14 = arith.maximumf %11, %13 : vector<8x128xf32>
    %15 = vector.extract_strided_slice %3 {offsets = [0, 0], sizes = [8, 1], strides = [1, 1]} : vector<8x8xf32> to vector<8x1xf32>
    %16 = vector.extract_strided_slice %14 {offsets = [0, 0], sizes = [1, 128], strides = [1, 1]} : vector<8x128xf32> to vector<1x128xf32>
    %17 = vector.broadcast %15 : vector<8x1xf32> to vector<8x128xf32>
    %18 = vector.broadcast %16 : vector<1x128xf32> to vector<8x128xf32>
    %19 = arith.mulf %17, %18 : vector<8x128xf32>
    %20 = vector.extract_strided_slice %3 {offsets = [0, 1], sizes = [8, 1], strides = [1, 1]} : vector<8x8xf32> to vector<8x1xf32>
    %21 = vector.extract_strided_slice %14 {offsets = [1, 0], sizes = [1, 128], strides = [1, 1]} : vector<8x128xf32> to vector<1x128xf32>
    %22 = vector.broadcast %20 : vector<8x1xf32> to vector<8x128xf32>
    %23 = vector.broadcast %21 : vector<1x128xf32> to vector<8x128xf32>
    %24 = arith.mulf %22, %23 : vector<8x128xf32>
    %25 = arith.addf %19, %24 : vector<8x128xf32>
    %26 = vector.extract_strided_slice %3 {offsets = [0, 2], sizes = [8, 1], strides = [1, 1]} : vector<8x8xf32> to vector<8x1xf32>
    %27 = vector.extract_strided_slice %14 {offsets = [2, 0], sizes = [1, 128], strides = [1, 1]} : vector<8x128xf32> to vector<1x128xf32>
    %28 = vector.broadcast %26 : vector<8x1xf32> to vector<8x128xf32>
    %29 = vector.broadcast %27 : vector<1x128xf32> to vector<8x128xf32>
    %30 = arith.mulf %28, %29 : vector<8x128xf32>
    %31 = arith.addf %25, %30 : vector<8x128xf32>
    %32 = vector.extract_strided_slice %3 {offsets = [0, 3], sizes = [8, 1], strides = [1, 1]} : vector<8x8xf32> to vector<8x1xf32>
    %33 = vector.extract_strided_slice %14 {offsets = [3, 0], sizes = [1, 128], strides = [1, 1]} : vector<8x128xf32> to vector<1x128xf32>
    %34 = vector.broadcast %32 : vector<8x1xf32> to vector<8x128xf32>
    %35 = vector.broadcast %33 : vector<1x128xf32> to vector<8x128xf32>
    %36 = arith.mulf %34, %35 : vector<8x128xf32>
    %37 = arith.addf %31, %36 : vector<8x128xf32>
    %38 = vector.extract_strided_slice %3 {offsets = [0, 4], sizes = [8, 1], strides = [1, 1]} : vector<8x8xf32> to vector<8x1xf32>
    %39 = vector.extract_strided_slice %14 {offsets = [4, 0], sizes = [1, 128], strides = [1, 1]} : vector<8x128xf32> to vector<1x128xf32>
    %40 = vector.broadcast %38 : vector<8x1xf32> to vector<8x128xf32>
    %41 = vector.broadcast %39 : vector<1x128xf32> to vector<8x128xf32>
    %42 = arith.mulf %40, %41 : vector<8x128xf32>
    %43 = arith.addf %37, %42 : vector<8x128xf32>
    %44 = vector.extract_strided_slice %3 {offsets = [0, 5], sizes = [8, 1], strides = [1, 1]} : vector<8x8xf32> to vector<8x1xf32>
    %45 = vector.extract_strided_slice %14 {offsets = [5, 0], sizes = [1, 128], strides = [1, 1]} : vector<8x128xf32> to vector<1x128xf32>
    %46 = vector.broadcast %44 : vector<8x1xf32> to vector<8x128xf32>
    %47 = vector.broadcast %45 : vector<1x128xf32> to vector<8x128xf32>
    %48 = arith.mulf %46, %47 : vector<8x128xf32>
    %49 = arith.addf %43, %48 : vector<8x128xf32>
    %50 = vector.extract_strided_slice %3 {offsets = [0, 6], sizes = [8, 1], strides = [1, 1]} : vector<8x8xf32> to vector<8x1xf32>
    %51 = vector.extract_strided_slice %14 {offsets = [6, 0], sizes = [1, 128], strides = [1, 1]} : vector<8x128xf32> to vector<1x128xf32>
    %52 = vector.broadcast %50 : vector<8x1xf32> to vector<8x128xf32>
    %53 = vector.broadcast %51 : vector<1x128xf32> to vector<8x128xf32>
    %54 = arith.mulf %52, %53 : vector<8x128xf32>
    %55 = arith.addf %49, %54 : vector<8x128xf32>
    %56 = vector.extract_strided_slice %3 {offsets = [0, 7], sizes = [8, 1], strides = [1, 1]} : vector<8x8xf32> to vector<8x1xf32>
    %57 = vector.extract_strided_slice %14 {offsets = [7, 0], sizes = [1, 128], strides = [1, 1]} : vector<8x128xf32> to vector<1x128xf32>
    %58 = vector.broadcast %56 : vector<8x1xf32> to vector<8x128xf32>
    %59 = vector.broadcast %57 : vector<1x128xf32> to vector<8x128xf32>
    %60 = arith.mulf %58, %59 : vector<8x128xf32>
    %61 = arith.addf %55, %60 : vector<8x128xf32>
    %c2 = arith.constant 2 : index
    %c0_10 = arith.constant 0 : index
    %c0_11 = arith.constant 0 : index
    %62 = vector.load %arg4[%c2, %c0_10, %c0_11] : memref<19x8x1xf32, #tpu.memory_space<vmem>>, vector<1x8x1xf32>
    %63 = vector.shape_cast %62 : vector<1x8x1xf32> to vector<8x1xf32>
    %64 = vector.broadcast %63 : vector<8x1xf32> to vector<8x128xf32>
    %65 = arith.addf %61, %64 : vector<8x128xf32>
    %c1_12 = arith.constant 1 : index
    %c0_13 = arith.constant 0 : index
    %c0_14 = arith.constant 0 : index
    %66 = vector.load %arg5[%c1_12, %c0_13, %c0_14] : memref<4x8x8xf32, #tpu.memory_space<vmem>>, vector<1x8x8xf32>
    %67 = vector.shape_cast %66 : vector<1x8x8xf32> to vector<8x8xf32>
    %c3 = arith.constant 3 : index
    %c0_15 = arith.constant 0 : index
    %c0_16 = arith.constant 0 : index
    %68 = vector.load %arg4[%c3, %c0_15, %c0_16] : memref<19x8x1xf32, #tpu.memory_space<vmem>>, vector<1x8x1xf32>
    %69 = vector.shape_cast %68 : vector<1x8x1xf32> to vector<8x1xf32>
    %70 = vector.broadcast %69 : vector<8x1xf32> to vector<8x128xf32>
    %71 = arith.mulf %65, %70 : vector<8x128xf32>
    %c4 = arith.constant 4 : index
    %c0_17 = arith.constant 0 : index
    %c0_18 = arith.constant 0 : index
    %72 = vector.load %arg4[%c4, %c0_17, %c0_18] : memref<19x8x1xf32, #tpu.memory_space<vmem>>, vector<1x8x1xf32>
    %73 = vector.shape_cast %72 : vector<1x8x1xf32> to vector<8x1xf32>
    %74 = vector.broadcast %73 : vector<8x1xf32> to vector<8x128xf32>
    %75 = arith.addf %71, %74 : vector<8x128xf32>
    %cst_19 = arith.constant 0.00999999977 : f32
    %76 = vector.broadcast %cst_19 : f32 to vector<8x128xf32>
    %77 = arith.mulf %76, %75 : vector<8x128xf32>
    %78 = arith.maximumf %75, %77 : vector<8x128xf32>
    %79 = vector.extract_strided_slice %67 {offsets = [0, 0], sizes = [8, 1], strides = [1, 1]} : vector<8x8xf32> to vector<8x1xf32>
    %80 = vector.extract_strided_slice %78 {offsets = [0, 0], sizes = [1, 128], strides = [1, 1]} : vector<8x128xf32> to vector<1x128xf32>
    %81 = vector.broadcast %79 : vector<8x1xf32> to vector<8x128xf32>
    %82 = vector.broadcast %80 : vector<1x128xf32> to vector<8x128xf32>
    %83 = arith.mulf %81, %82 : vector<8x128xf32>
    %84 = vector.extract_strided_slice %67 {offsets = [0, 1], sizes = [8, 1], strides = [1, 1]} : vector<8x8xf32> to vector<8x1xf32>
    %85 = vector.extract_strided_slice %78 {offsets = [1, 0], sizes = [1, 128], strides = [1, 1]} : vector<8x128xf32> to vector<1x128xf32>
    %86 = vector.broadcast %84 : vector<8x1xf32> to vector<8x128xf32>
    %87 = vector.broadcast %85 : vector<1x128xf32> to vector<8x128xf32>
    %88 = arith.mulf %86, %87 : vector<8x128xf32>
    %89 = arith.addf %83, %88 : vector<8x128xf32>
    %90 = vector.extract_strided_slice %67 {offsets = [0, 2], sizes = [8, 1], strides = [1, 1]} : vector<8x8xf32> to vector<8x1xf32>
    %91 = vector.extract_strided_slice %78 {offsets = [2, 0], sizes = [1, 128], strides = [1, 1]} : vector<8x128xf32> to vector<1x128xf32>
    %92 = vector.broadcast %90 : vector<8x1xf32> to vector<8x128xf32>
    %93 = vector.broadcast %91 : vector<1x128xf32> to vector<8x128xf32>
    %94 = arith.mulf %92, %93 : vector<8x128xf32>
    %95 = arith.addf %89, %94 : vector<8x128xf32>
    %96 = vector.extract_strided_slice %67 {offsets = [0, 3], sizes = [8, 1], strides = [1, 1]} : vector<8x8xf32> to vector<8x1xf32>
    %97 = vector.extract_strided_slice %78 {offsets = [3, 0], sizes = [1, 128], strides = [1, 1]} : vector<8x128xf32> to vector<1x128xf32>
    %98 = vector.broadcast %96 : vector<8x1xf32> to vector<8x128xf32>
    %99 = vector.broadcast %97 : vector<1x128xf32> to vector<8x128xf32>
    %100 = arith.mulf %98, %99 : vector<8x128xf32>
    %101 = arith.addf %95, %100 : vector<8x128xf32>
    %102 = vector.extract_strided_slice %67 {offsets = [0, 4], sizes = [8, 1], strides = [1, 1]} : vector<8x8xf32> to vector<8x1xf32>
    %103 = vector.extract_strided_slice %78 {offsets = [4, 0], sizes = [1, 128], strides = [1, 1]} : vector<8x128xf32> to vector<1x128xf32>
    %104 = vector.broadcast %102 : vector<8x1xf32> to vector<8x128xf32>
    %105 = vector.broadcast %103 : vector<1x128xf32> to vector<8x128xf32>
    %106 = arith.mulf %104, %105 : vector<8x128xf32>
    %107 = arith.addf %101, %106 : vector<8x128xf32>
    %108 = vector.extract_strided_slice %67 {offsets = [0, 5], sizes = [8, 1], strides = [1, 1]} : vector<8x8xf32> to vector<8x1xf32>
    %109 = vector.extract_strided_slice %78 {offsets = [5, 0], sizes = [1, 128], strides = [1, 1]} : vector<8x128xf32> to vector<1x128xf32>
    %110 = vector.broadcast %108 : vector<8x1xf32> to vector<8x128xf32>
    %111 = vector.broadcast %109 : vector<1x128xf32> to vector<8x128xf32>
    %112 = arith.mulf %110, %111 : vector<8x128xf32>
    %113 = arith.addf %107, %112 : vector<8x128xf32>
    %114 = vector.extract_strided_slice %67 {offsets = [0, 6], sizes = [8, 1], strides = [1, 1]} : vector<8x8xf32> to vector<8x1xf32>
    %115 = vector.extract_strided_slice %78 {offsets = [6, 0], sizes = [1, 128], strides = [1, 1]} : vector<8x128xf32> to vector<1x128xf32>
    %116 = vector.broadcast %114 : vector<8x1xf32> to vector<8x128xf32>
    %117 = vector.broadcast %115 : vector<1x128xf32> to vector<8x128xf32>
    %118 = arith.mulf %116, %117 : vector<8x128xf32>
    %119 = arith.addf %113, %118 : vector<8x128xf32>
    %120 = vector.extract_strided_slice %67 {offsets = [0, 7], sizes = [8, 1], strides = [1, 1]} : vector<8x8xf32> to vector<8x1xf32>
    %121 = vector.extract_strided_slice %78 {offsets = [7, 0], sizes = [1, 128], strides = [1, 1]} : vector<8x128xf32> to vector<1x128xf32>
    %122 = vector.broadcast %120 : vector<8x1xf32> to vector<8x128xf32>
    %123 = vector.broadcast %121 : vector<1x128xf32> to vector<8x128xf32>
    %124 = arith.mulf %122, %123 : vector<8x128xf32>
    %125 = arith.addf %119, %124 : vector<8x128xf32>
    %c5 = arith.constant 5 : index
    %c0_20 = arith.constant 0 : index
    %c0_21 = arith.constant 0 : index
    %126 = vector.load %arg4[%c5, %c0_20, %c0_21] : memref<19x8x1xf32, #tpu.memory_space<vmem>>, vector<1x8x1xf32>
    %127 = vector.shape_cast %126 : vector<1x8x1xf32> to vector<8x1xf32>
    %128 = vector.broadcast %127 : vector<8x1xf32> to vector<8x128xf32>
    %129 = arith.addf %125, %128 : vector<8x128xf32>
    %130 = arith.addf %129, %1 : vector<8x128xf32>
    %c0_22 = arith.constant 0 : index
    %c0_23 = arith.constant 0 : index
    %c0_24 = arith.constant 0 : index
    %131 = vector.load %arg6[%c0_22, %c0_23, %c0_24] : memref<3x8x8xf32, #tpu.memory_space<vmem>>, vector<1x8x8xf32>
    %132 = vector.shape_cast %131 : vector<1x8x8xf32> to vector<8x8xf32>
    %c12 = arith.constant 12 : index
    %c0_25 = arith.constant 0 : index
    %c0_26 = arith.constant 0 : index
    %133 = vector.load %arg4[%c12, %c0_25, %c0_26] : memref<19x8x1xf32, #tpu.memory_space<vmem>>, vector<1x8x1xf32>
    %134 = vector.shape_cast %133 : vector<1x8x1xf32> to vector<8x1xf32>
    %135 = vector.broadcast %134 : vector<8x1xf32> to vector<8x128xf32>
    %136 = arith.mulf %130, %135 : vector<8x128xf32>
    %c13 = arith.constant 13 : index
    %c0_27 = arith.constant 0 : index
    %c0_28 = arith.constant 0 : index
    %137 = vector.load %arg4[%c13, %c0_27, %c0_28] : memref<19x8x1xf32, #tpu.memory_space<vmem>>, vector<1x8x1xf32>
    %138 = vector.shape_cast %137 : vector<1x8x1xf32> to vector<8x1xf32>
    %139 = vector.broadcast %138 : vector<8x1xf32> to vector<8x128xf32>
    %140 = arith.addf %136, %139 : vector<8x128xf32>
    %cst_29 = arith.constant 0.00999999977 : f32
    %141 = vector.broadcast %cst_29 : f32 to vector<8x128xf32>
    %142 = arith.mulf %141, %140 : vector<8x128xf32>
    %143 = arith.maximumf %140, %142 : vector<8x128xf32>
    %144 = vector.extract_strided_slice %132 {offsets = [0, 0], sizes = [8, 1], strides = [1, 1]} : vector<8x8xf32> to vector<8x1xf32>
    %145 = vector.extract_strided_slice %143 {offsets = [0, 0], sizes = [1, 128], strides = [1, 1]} : vector<8x128xf32> to vector<1x128xf32>
    %146 = vector.broadcast %144 : vector<8x1xf32> to vector<8x128xf32>
    %147 = vector.broadcast %145 : vector<1x128xf32> to vector<8x128xf32>
    %148 = arith.mulf %146, %147 : vector<8x128xf32>
    %149 = vector.extract_strided_slice %132 {offsets = [0, 1], sizes = [8, 1], strides = [1, 1]} : vector<8x8xf32> to vector<8x1xf32>
    %150 = vector.extract_strided_slice %143 {offsets = [1, 0], sizes = [1, 128], strides = [1, 1]} : vector<8x128xf32> to vector<1x128xf32>
    %151 = vector.broadcast %149 : vector<8x1xf32> to vector<8x128xf32>
    %152 = vector.broadcast %150 : vector<1x128xf32> to vector<8x128xf32>
    %153 = arith.mulf %151, %152 : vector<8x128xf32>
    %154 = arith.addf %148, %153 : vector<8x128xf32>
    %155 = vector.extract_strided_slice %132 {offsets = [0, 2], sizes = [8, 1], strides = [1, 1]} : vector<8x8xf32> to vector<8x1xf32>
    %156 = vector.extract_strided_slice %143 {offsets = [2, 0], sizes = [1, 128], strides = [1, 1]} : vector<8x128xf32> to vector<1x128xf32>
    %157 = vector.broadcast %155 : vector<8x1xf32> to vector<8x128xf32>
    %158 = vector.broadcast %156 : vector<1x128xf32> to vector<8x128xf32>
    %159 = arith.mulf %157, %158 : vector<8x128xf32>
    %160 = arith.addf %154, %159 : vector<8x128xf32>
    %161 = vector.extract_strided_slice %132 {offsets = [0, 3], sizes = [8, 1], strides = [1, 1]} : vector<8x8xf32> to vector<8x1xf32>
    %162 = vector.extract_strided_slice %143 {offsets = [3, 0], sizes = [1, 128], strides = [1, 1]} : vector<8x128xf32> to vector<1x128xf32>
    %163 = vector.broadcast %161 : vector<8x1xf32> to vector<8x128xf32>
    %164 = vector.broadcast %162 : vector<1x128xf32> to vector<8x128xf32>
    %165 = arith.mulf %163, %164 : vector<8x128xf32>
    %166 = arith.addf %160, %165 : vector<8x128xf32>
    %167 = vector.extract_strided_slice %132 {offsets = [0, 4], sizes = [8, 1], strides = [1, 1]} : vector<8x8xf32> to vector<8x1xf32>
    %168 = vector.extract_strided_slice %143 {offsets = [4, 0], sizes = [1, 128], strides = [1, 1]} : vector<8x128xf32> to vector<1x128xf32>
    %169 = vector.broadcast %167 : vector<8x1xf32> to vector<8x128xf32>
    %170 = vector.broadcast %168 : vector<1x128xf32> to vector<8x128xf32>
    %171 = arith.mulf %169, %170 : vector<8x128xf32>
    %172 = arith.addf %166, %171 : vector<8x128xf32>
    %173 = vector.extract_strided_slice %132 {offsets = [0, 5], sizes = [8, 1], strides = [1, 1]} : vector<8x8xf32> to vector<8x1xf32>
    %174 = vector.extract_strided_slice %143 {offsets = [5, 0], sizes = [1, 128], strides = [1, 1]} : vector<8x128xf32> to vector<1x128xf32>
    %175 = vector.broadcast %173 : vector<8x1xf32> to vector<8x128xf32>
    %176 = vector.broadcast %174 : vector<1x128xf32> to vector<8x128xf32>
    %177 = arith.mulf %175, %176 : vector<8x128xf32>
    %178 = arith.addf %172, %177 : vector<8x128xf32>
    %179 = vector.extract_strided_slice %132 {offsets = [0, 6], sizes = [8, 1], strides = [1, 1]} : vector<8x8xf32> to vector<8x1xf32>
    %180 = vector.extract_strided_slice %143 {offsets = [6, 0], sizes = [1, 128], strides = [1, 1]} : vector<8x128xf32> to vector<1x128xf32>
    %181 = vector.broadcast %179 : vector<8x1xf32> to vector<8x128xf32>
    %182 = vector.broadcast %180 : vector<1x128xf32> to vector<8x128xf32>
    %183 = arith.mulf %181, %182 : vector<8x128xf32>
    %184 = arith.addf %178, %183 : vector<8x128xf32>
    %185 = vector.extract_strided_slice %132 {offsets = [0, 7], sizes = [8, 1], strides = [1, 1]} : vector<8x8xf32> to vector<8x1xf32>
    %186 = vector.extract_strided_slice %143 {offsets = [7, 0], sizes = [1, 128], strides = [1, 1]} : vector<8x128xf32> to vector<1x128xf32>
    %187 = vector.broadcast %185 : vector<8x1xf32> to vector<8x128xf32>
    %188 = vector.broadcast %186 : vector<1x128xf32> to vector<8x128xf32>
    %189 = arith.mulf %187, %188 : vector<8x128xf32>
    %190 = arith.addf %184, %189 : vector<8x128xf32>
    %c2_30 = arith.constant 2 : index
    %c0_31 = arith.constant 0 : index
    %c0_32 = arith.constant 0 : index
    %191 = vector.load %arg5[%c2_30, %c0_31, %c0_32] : memref<4x8x8xf32, #tpu.memory_space<vmem>>, vector<1x8x8xf32>
    %192 = vector.shape_cast %191 : vector<1x8x8xf32> to vector<8x8xf32>
    %c6 = arith.constant 6 : index
    %c0_33 = arith.constant 0 : index
    %c0_34 = arith.constant 0 : index
    %193 = vector.load %arg4[%c6, %c0_33, %c0_34] : memref<19x8x1xf32, #tpu.memory_space<vmem>>, vector<1x8x1xf32>
    %194 = vector.shape_cast %193 : vector<1x8x1xf32> to vector<8x1xf32>
    %195 = vector.broadcast %194 : vector<8x1xf32> to vector<8x128xf32>
    %196 = arith.mulf %130, %195 : vector<8x128xf32>
    %c7 = arith.constant 7 : index
    %c0_35 = arith.constant 0 : index
    %c0_36 = arith.constant 0 : index
    %197 = vector.load %arg4[%c7, %c0_35, %c0_36] : memref<19x8x1xf32, #tpu.memory_space<vmem>>, vector<1x8x1xf32>
    %198 = vector.shape_cast %197 : vector<1x8x1xf32> to vector<8x1xf32>
    %199 = vector.broadcast %198 : vector<8x1xf32> to vector<8x128xf32>
    %200 = arith.addf %196, %199 : vector<8x128xf32>
    %cst_37 = arith.constant 0.00999999977 : f32
    %201 = vector.broadcast %cst_37 : f32 to vector<8x128xf32>
    %202 = arith.mulf %201, %200 : vector<8x128xf32>
    %203 = arith.maximumf %200, %202 : vector<8x128xf32>
    %204 = vector.extract_strided_slice %192 {offsets = [0, 0], sizes = [8, 1], strides = [1, 1]} : vector<8x8xf32> to vector<8x1xf32>
    %205 = vector.extract_strided_slice %203 {offsets = [0, 0], sizes = [1, 128], strides = [1, 1]} : vector<8x128xf32> to vector<1x128xf32>
    %206 = vector.broadcast %204 : vector<8x1xf32> to vector<8x128xf32>
    %207 = vector.broadcast %205 : vector<1x128xf32> to vector<8x128xf32>
    %208 = arith.mulf %206, %207 : vector<8x128xf32>
    %209 = vector.extract_strided_slice %192 {offsets = [0, 1], sizes = [8, 1], strides = [1, 1]} : vector<8x8xf32> to vector<8x1xf32>
    %210 = vector.extract_strided_slice %203 {offsets = [1, 0], sizes = [1, 128], strides = [1, 1]} : vector<8x128xf32> to vector<1x128xf32>
    %211 = vector.broadcast %209 : vector<8x1xf32> to vector<8x128xf32>
    %212 = vector.broadcast %210 : vector<1x128xf32> to vector<8x128xf32>
    %213 = arith.mulf %211, %212 : vector<8x128xf32>
    %214 = arith.addf %208, %213 : vector<8x128xf32>
    %215 = vector.extract_strided_slice %192 {offsets = [0, 2], sizes = [8, 1], strides = [1, 1]} : vector<8x8xf32> to vector<8x1xf32>
    %216 = vector.extract_strided_slice %203 {offsets = [2, 0], sizes = [1, 128], strides = [1, 1]} : vector<8x128xf32> to vector<1x128xf32>
    %217 = vector.broadcast %215 : vector<8x1xf32> to vector<8x128xf32>
    %218 = vector.broadcast %216 : vector<1x128xf32> to vector<8x128xf32>
    %219 = arith.mulf %217, %218 : vector<8x128xf32>
    %220 = arith.addf %214, %219 : vector<8x128xf32>
    %221 = vector.extract_strided_slice %192 {offsets = [0, 3], sizes = [8, 1], strides = [1, 1]} : vector<8x8xf32> to vector<8x1xf32>
    %222 = vector.extract_strided_slice %203 {offsets = [3, 0], sizes = [1, 128], strides = [1, 1]} : vector<8x128xf32> to vector<1x128xf32>
    %223 = vector.broadcast %221 : vector<8x1xf32> to vector<8x128xf32>
    %224 = vector.broadcast %222 : vector<1x128xf32> to vector<8x128xf32>
    %225 = arith.mulf %223, %224 : vector<8x128xf32>
    %226 = arith.addf %220, %225 : vector<8x128xf32>
    %227 = vector.extract_strided_slice %192 {offsets = [0, 4], sizes = [8, 1], strides = [1, 1]} : vector<8x8xf32> to vector<8x1xf32>
    %228 = vector.extract_strided_slice %203 {offsets = [4, 0], sizes = [1, 128], strides = [1, 1]} : vector<8x128xf32> to vector<1x128xf32>
    %229 = vector.broadcast %227 : vector<8x1xf32> to vector<8x128xf32>
    %230 = vector.broadcast %228 : vector<1x128xf32> to vector<8x128xf32>
    %231 = arith.mulf %229, %230 : vector<8x128xf32>
    %232 = arith.addf %226, %231 : vector<8x128xf32>
    %233 = vector.extract_strided_slice %192 {offsets = [0, 5], sizes = [8, 1], strides = [1, 1]} : vector<8x8xf32> to vector<8x1xf32>
    %234 = vector.extract_strided_slice %203 {offsets = [5, 0], sizes = [1, 128], strides = [1, 1]} : vector<8x128xf32> to vector<1x128xf32>
    %235 = vector.broadcast %233 : vector<8x1xf32> to vector<8x128xf32>
    %236 = vector.broadcast %234 : vector<1x128xf32> to vector<8x128xf32>
    %237 = arith.mulf %235, %236 : vector<8x128xf32>
    %238 = arith.addf %232, %237 : vector<8x128xf32>
    %239 = vector.extract_strided_slice %192 {offsets = [0, 6], sizes = [8, 1], strides = [1, 1]} : vector<8x8xf32> to vector<8x1xf32>
    %240 = vector.extract_strided_slice %203 {offsets = [6, 0], sizes = [1, 128], strides = [1, 1]} : vector<8x128xf32> to vector<1x128xf32>
    %241 = vector.broadcast %239 : vector<8x1xf32> to vector<8x128xf32>
    %242 = vector.broadcast %240 : vector<1x128xf32> to vector<8x128xf32>
    %243 = arith.mulf %241, %242 : vector<8x128xf32>
    %244 = arith.addf %238, %243 : vector<8x128xf32>
    %245 = vector.extract_strided_slice %192 {offsets = [0, 7], sizes = [8, 1], strides = [1, 1]} : vector<8x8xf32> to vector<8x1xf32>
    %246 = vector.extract_strided_slice %203 {offsets = [7, 0], sizes = [1, 128], strides = [1, 1]} : vector<8x128xf32> to vector<1x128xf32>
    %247 = vector.broadcast %245 : vector<8x1xf32> to vector<8x128xf32>
    %248 = vector.broadcast %246 : vector<1x128xf32> to vector<8x128xf32>
    %249 = arith.mulf %247, %248 : vector<8x128xf32>
    %250 = arith.addf %244, %249 : vector<8x128xf32>
    %c8 = arith.constant 8 : index
    %c0_38 = arith.constant 0 : index
    %c0_39 = arith.constant 0 : index
    %251 = vector.load %arg4[%c8, %c0_38, %c0_39] : memref<19x8x1xf32, #tpu.memory_space<vmem>>, vector<1x8x1xf32>
    %252 = vector.shape_cast %251 : vector<1x8x1xf32> to vector<8x1xf32>
    %253 = vector.broadcast %252 : vector<8x1xf32> to vector<8x128xf32>
    %254 = arith.addf %250, %253 : vector<8x128xf32>
    %c3_40 = arith.constant 3 : index
    %c0_41 = arith.constant 0 : index
    %c0_42 = arith.constant 0 : index
    %255 = vector.load %arg5[%c3_40, %c0_41, %c0_42] : memref<4x8x8xf32, #tpu.memory_space<vmem>>, vector<1x8x8xf32>
    %256 = vector.shape_cast %255 : vector<1x8x8xf32> to vector<8x8xf32>
    %c9 = arith.constant 9 : index
    %c0_43 = arith.constant 0 : index
    %c0_44 = arith.constant 0 : index
    %257 = vector.load %arg4[%c9, %c0_43, %c0_44] : memref<19x8x1xf32, #tpu.memory_space<vmem>>, vector<1x8x1xf32>
    %258 = vector.shape_cast %257 : vector<1x8x1xf32> to vector<8x1xf32>
    %259 = vector.broadcast %258 : vector<8x1xf32> to vector<8x128xf32>
    %260 = arith.mulf %254, %259 : vector<8x128xf32>
    %c10 = arith.constant 10 : index
    %c0_45 = arith.constant 0 : index
    %c0_46 = arith.constant 0 : index
    %261 = vector.load %arg4[%c10, %c0_45, %c0_46] : memref<19x8x1xf32, #tpu.memory_space<vmem>>, vector<1x8x1xf32>
    %262 = vector.shape_cast %261 : vector<1x8x1xf32> to vector<8x1xf32>
    %263 = vector.broadcast %262 : vector<8x1xf32> to vector<8x128xf32>
    %264 = arith.addf %260, %263 : vector<8x128xf32>
    %cst_47 = arith.constant 0.00999999977 : f32
    %265 = vector.broadcast %cst_47 : f32 to vector<8x128xf32>
    %266 = arith.mulf %265, %264 : vector<8x128xf32>
    %267 = arith.maximumf %264, %266 : vector<8x128xf32>
    %268 = vector.extract_strided_slice %256 {offsets = [0, 0], sizes = [8, 1], strides = [1, 1]} : vector<8x8xf32> to vector<8x1xf32>
    %269 = vector.extract_strided_slice %267 {offsets = [0, 0], sizes = [1, 128], strides = [1, 1]} : vector<8x128xf32> to vector<1x128xf32>
    %270 = vector.broadcast %268 : vector<8x1xf32> to vector<8x128xf32>
    %271 = vector.broadcast %269 : vector<1x128xf32> to vector<8x128xf32>
    %272 = arith.mulf %270, %271 : vector<8x128xf32>
    %273 = vector.extract_strided_slice %256 {offsets = [0, 1], sizes = [8, 1], strides = [1, 1]} : vector<8x8xf32> to vector<8x1xf32>
    %274 = vector.extract_strided_slice %267 {offsets = [1, 0], sizes = [1, 128], strides = [1, 1]} : vector<8x128xf32> to vector<1x128xf32>
    %275 = vector.broadcast %273 : vector<8x1xf32> to vector<8x128xf32>
    %276 = vector.broadcast %274 : vector<1x128xf32> to vector<8x128xf32>
    %277 = arith.mulf %275, %276 : vector<8x128xf32>
    %278 = arith.addf %272, %277 : vector<8x128xf32>
    %279 = vector.extract_strided_slice %256 {offsets = [0, 2], sizes = [8, 1], strides = [1, 1]} : vector<8x8xf32> to vector<8x1xf32>
    %280 = vector.extract_strided_slice %267 {offsets = [2, 0], sizes = [1, 128], strides = [1, 1]} : vector<8x128xf32> to vector<1x128xf32>
    %281 = vector.broadcast %279 : vector<8x1xf32> to vector<8x128xf32>
    %282 = vector.broadcast %280 : vector<1x128xf32> to vector<8x128xf32>
    %283 = arith.mulf %281, %282 : vector<8x128xf32>
    %284 = arith.addf %278, %283 : vector<8x128xf32>
    %285 = vector.extract_strided_slice %256 {offsets = [0, 3], sizes = [8, 1], strides = [1, 1]} : vector<8x8xf32> to vector<8x1xf32>
    %286 = vector.extract_strided_slice %267 {offsets = [3, 0], sizes = [1, 128], strides = [1, 1]} : vector<8x128xf32> to vector<1x128xf32>
    %287 = vector.broadcast %285 : vector<8x1xf32> to vector<8x128xf32>
    %288 = vector.broadcast %286 : vector<1x128xf32> to vector<8x128xf32>
    %289 = arith.mulf %287, %288 : vector<8x128xf32>
    %290 = arith.addf %284, %289 : vector<8x128xf32>
    %291 = vector.extract_strided_slice %256 {offsets = [0, 4], sizes = [8, 1], strides = [1, 1]} : vector<8x8xf32> to vector<8x1xf32>
    %292 = vector.extract_strided_slice %267 {offsets = [4, 0], sizes = [1, 128], strides = [1, 1]} : vector<8x128xf32> to vector<1x128xf32>
    %293 = vector.broadcast %291 : vector<8x1xf32> to vector<8x128xf32>
    %294 = vector.broadcast %292 : vector<1x128xf32> to vector<8x128xf32>
    %295 = arith.mulf %293, %294 : vector<8x128xf32>
    %296 = arith.addf %290, %295 : vector<8x128xf32>
    %297 = vector.extract_strided_slice %256 {offsets = [0, 5], sizes = [8, 1], strides = [1, 1]} : vector<8x8xf32> to vector<8x1xf32>
    %298 = vector.extract_strided_slice %267 {offsets = [5, 0], sizes = [1, 128], strides = [1, 1]} : vector<8x128xf32> to vector<1x128xf32>
    %299 = vector.broadcast %297 : vector<8x1xf32> to vector<8x128xf32>
    %300 = vector.broadcast %298 : vector<1x128xf32> to vector<8x128xf32>
    %301 = arith.mulf %299, %300 : vector<8x128xf32>
    %302 = arith.addf %296, %301 : vector<8x128xf32>
    %303 = vector.extract_strided_slice %256 {offsets = [0, 6], sizes = [8, 1], strides = [1, 1]} : vector<8x8xf32> to vector<8x1xf32>
    %304 = vector.extract_strided_slice %267 {offsets = [6, 0], sizes = [1, 128], strides = [1, 1]} : vector<8x128xf32> to vector<1x128xf32>
    %305 = vector.broadcast %303 : vector<8x1xf32> to vector<8x128xf32>
    %306 = vector.broadcast %304 : vector<1x128xf32> to vector<8x128xf32>
    %307 = arith.mulf %305, %306 : vector<8x128xf32>
    %308 = arith.addf %302, %307 : vector<8x128xf32>
    %309 = vector.extract_strided_slice %256 {offsets = [0, 7], sizes = [8, 1], strides = [1, 1]} : vector<8x8xf32> to vector<8x1xf32>
    %310 = vector.extract_strided_slice %267 {offsets = [7, 0], sizes = [1, 128], strides = [1, 1]} : vector<8x128xf32> to vector<1x128xf32>
    %311 = vector.broadcast %309 : vector<8x1xf32> to vector<8x128xf32>
    %312 = vector.broadcast %310 : vector<1x128xf32> to vector<8x128xf32>
    %313 = arith.mulf %311, %312 : vector<8x128xf32>
    %314 = arith.addf %308, %313 : vector<8x128xf32>
    %c11 = arith.constant 11 : index
    %c0_48 = arith.constant 0 : index
    %c0_49 = arith.constant 0 : index
    %315 = vector.load %arg4[%c11, %c0_48, %c0_49] : memref<19x8x1xf32, #tpu.memory_space<vmem>>, vector<1x8x1xf32>
    %316 = vector.shape_cast %315 : vector<1x8x1xf32> to vector<8x1xf32>
    %317 = vector.broadcast %316 : vector<8x1xf32> to vector<8x128xf32>
    %318 = arith.addf %314, %317 : vector<8x128xf32>
    %319 = arith.addf %318, %130 : vector<8x128xf32>
    %c1_50 = arith.constant 1 : index
    %c0_51 = arith.constant 0 : index
    %c0_52 = arith.constant 0 : index
    %320 = vector.load %arg6[%c1_50, %c0_51, %c0_52] : memref<3x8x8xf32, #tpu.memory_space<vmem>>, vector<1x8x8xf32>
    %321 = vector.shape_cast %320 : vector<1x8x8xf32> to vector<8x8xf32>
    %c14 = arith.constant 14 : index
    %c0_53 = arith.constant 0 : index
    %c0_54 = arith.constant 0 : index
    %322 = vector.load %arg4[%c14, %c0_53, %c0_54] : memref<19x8x1xf32, #tpu.memory_space<vmem>>, vector<1x8x1xf32>
    %323 = vector.shape_cast %322 : vector<1x8x1xf32> to vector<8x1xf32>
    %324 = vector.broadcast %323 : vector<8x1xf32> to vector<8x128xf32>
    %325 = arith.mulf %319, %324 : vector<8x128xf32>
    %c15 = arith.constant 15 : index
    %c0_55 = arith.constant 0 : index
    %c0_56 = arith.constant 0 : index
    %326 = vector.load %arg4[%c15, %c0_55, %c0_56] : memref<19x8x1xf32, #tpu.memory_space<vmem>>, vector<1x8x1xf32>
    %327 = vector.shape_cast %326 : vector<1x8x1xf32> to vector<8x1xf32>
    %328 = vector.broadcast %327 : vector<8x1xf32> to vector<8x128xf32>
    %329 = arith.addf %325, %328 : vector<8x128xf32>
    %cst_57 = arith.constant 0.00999999977 : f32
    %330 = vector.broadcast %cst_57 : f32 to vector<8x128xf32>
    %331 = arith.mulf %330, %329 : vector<8x128xf32>
    %332 = arith.maximumf %329, %331 : vector<8x128xf32>
    %333 = vector.extract_strided_slice %321 {offsets = [0, 0], sizes = [8, 1], strides = [1, 1]} : vector<8x8xf32> to vector<8x1xf32>
    %334 = vector.extract_strided_slice %332 {offsets = [0, 0], sizes = [1, 128], strides = [1, 1]} : vector<8x128xf32> to vector<1x128xf32>
    %335 = vector.broadcast %333 : vector<8x1xf32> to vector<8x128xf32>
    %336 = vector.broadcast %334 : vector<1x128xf32> to vector<8x128xf32>
    %337 = arith.mulf %335, %336 : vector<8x128xf32>
    %338 = vector.extract_strided_slice %321 {offsets = [0, 1], sizes = [8, 1], strides = [1, 1]} : vector<8x8xf32> to vector<8x1xf32>
    %339 = vector.extract_strided_slice %332 {offsets = [1, 0], sizes = [1, 128], strides = [1, 1]} : vector<8x128xf32> to vector<1x128xf32>
    %340 = vector.broadcast %338 : vector<8x1xf32> to vector<8x128xf32>
    %341 = vector.broadcast %339 : vector<1x128xf32> to vector<8x128xf32>
    %342 = arith.mulf %340, %341 : vector<8x128xf32>
    %343 = arith.addf %337, %342 : vector<8x128xf32>
    %344 = vector.extract_strided_slice %321 {offsets = [0, 2], sizes = [8, 1], strides = [1, 1]} : vector<8x8xf32> to vector<8x1xf32>
    %345 = vector.extract_strided_slice %332 {offsets = [2, 0], sizes = [1, 128], strides = [1, 1]} : vector<8x128xf32> to vector<1x128xf32>
    %346 = vector.broadcast %344 : vector<8x1xf32> to vector<8x128xf32>
    %347 = vector.broadcast %345 : vector<1x128xf32> to vector<8x128xf32>
    %348 = arith.mulf %346, %347 : vector<8x128xf32>
    %349 = arith.addf %343, %348 : vector<8x128xf32>
    %350 = vector.extract_strided_slice %321 {offsets = [0, 3], sizes = [8, 1], strides = [1, 1]} : vector<8x8xf32> to vector<8x1xf32>
    %351 = vector.extract_strided_slice %332 {offsets = [3, 0], sizes = [1, 128], strides = [1, 1]} : vector<8x128xf32> to vector<1x128xf32>
    %352 = vector.broadcast %350 : vector<8x1xf32> to vector<8x128xf32>
    %353 = vector.broadcast %351 : vector<1x128xf32> to vector<8x128xf32>
    %354 = arith.mulf %352, %353 : vector<8x128xf32>
    %355 = arith.addf %349, %354 : vector<8x128xf32>
    %356 = vector.extract_strided_slice %321 {offsets = [0, 4], sizes = [8, 1], strides = [1, 1]} : vector<8x8xf32> to vector<8x1xf32>
    %357 = vector.extract_strided_slice %332 {offsets = [4, 0], sizes = [1, 128], strides = [1, 1]} : vector<8x128xf32> to vector<1x128xf32>
    %358 = vector.broadcast %356 : vector<8x1xf32> to vector<8x128xf32>
    %359 = vector.broadcast %357 : vector<1x128xf32> to vector<8x128xf32>
    %360 = arith.mulf %358, %359 : vector<8x128xf32>
    %361 = arith.addf %355, %360 : vector<8x128xf32>
    %362 = vector.extract_strided_slice %321 {offsets = [0, 5], sizes = [8, 1], strides = [1, 1]} : vector<8x8xf32> to vector<8x1xf32>
    %363 = vector.extract_strided_slice %332 {offsets = [5, 0], sizes = [1, 128], strides = [1, 1]} : vector<8x128xf32> to vector<1x128xf32>
    %364 = vector.broadcast %362 : vector<8x1xf32> to vector<8x128xf32>
    %365 = vector.broadcast %363 : vector<1x128xf32> to vector<8x128xf32>
    %366 = arith.mulf %364, %365 : vector<8x128xf32>
    %367 = arith.addf %361, %366 : vector<8x128xf32>
    %368 = vector.extract_strided_slice %321 {offsets = [0, 6], sizes = [8, 1], strides = [1, 1]} : vector<8x8xf32> to vector<8x1xf32>
    %369 = vector.extract_strided_slice %332 {offsets = [6, 0], sizes = [1, 128], strides = [1, 1]} : vector<8x128xf32> to vector<1x128xf32>
    %370 = vector.broadcast %368 : vector<8x1xf32> to vector<8x128xf32>
    %371 = vector.broadcast %369 : vector<1x128xf32> to vector<8x128xf32>
    %372 = arith.mulf %370, %371 : vector<8x128xf32>
    %373 = arith.addf %367, %372 : vector<8x128xf32>
    %374 = vector.extract_strided_slice %321 {offsets = [0, 7], sizes = [8, 1], strides = [1, 1]} : vector<8x8xf32> to vector<8x1xf32>
    %375 = vector.extract_strided_slice %332 {offsets = [7, 0], sizes = [1, 128], strides = [1, 1]} : vector<8x128xf32> to vector<1x128xf32>
    %376 = vector.broadcast %374 : vector<8x1xf32> to vector<8x128xf32>
    %377 = vector.broadcast %375 : vector<1x128xf32> to vector<8x128xf32>
    %378 = arith.mulf %376, %377 : vector<8x128xf32>
    %379 = arith.addf %373, %378 : vector<8x128xf32>
    %380 = arith.addf %190, %379 : vector<8x128xf32>
    %c2_58 = arith.constant 2 : index
    %c0_59 = arith.constant 0 : index
    %c0_60 = arith.constant 0 : index
    %381 = vector.load %arg6[%c2_58, %c0_59, %c0_60] : memref<3x8x8xf32, #tpu.memory_space<vmem>>, vector<1x8x8xf32>
    %382 = vector.shape_cast %381 : vector<1x8x8xf32> to vector<8x8xf32>
    %c0_61 = arith.constant 0 : index
    %c0_62 = arith.constant 0 : index
    %c0_63 = arith.constant 0 : index
    %383 = vector.load %arg3[%c0_61, %c0_62, %c0_63] : memref<1x8x128xf32, #tpu.memory_space<vmem>>, vector<1x8x128xf32>
    %384 = vector.shape_cast %383 : vector<1x8x128xf32> to vector<8x128xf32>
    %c16 = arith.constant 16 : index
    %c0_64 = arith.constant 0 : index
    %c0_65 = arith.constant 0 : index
    %385 = vector.load %arg4[%c16, %c0_64, %c0_65] : memref<19x8x1xf32, #tpu.memory_space<vmem>>, vector<1x8x1xf32>
    %386 = vector.shape_cast %385 : vector<1x8x1xf32> to vector<8x1xf32>
    %387 = vector.broadcast %386 : vector<8x1xf32> to vector<8x128xf32>
    %388 = arith.mulf %384, %387 : vector<8x128xf32>
    %c17 = arith.constant 17 : index
    %c0_66 = arith.constant 0 : index
    %c0_67 = arith.constant 0 : index
    %389 = vector.load %arg4[%c17, %c0_66, %c0_67] : memref<19x8x1xf32, #tpu.memory_space<vmem>>, vector<1x8x1xf32>
    %390 = vector.shape_cast %389 : vector<1x8x1xf32> to vector<8x1xf32>
    %391 = vector.broadcast %390 : vector<8x1xf32> to vector<8x128xf32>
    %392 = arith.addf %388, %391 : vector<8x128xf32>
    %cst_68 = arith.constant 0.00999999977 : f32
    %393 = vector.broadcast %cst_68 : f32 to vector<8x128xf32>
    %394 = arith.mulf %393, %392 : vector<8x128xf32>
    %395 = arith.maximumf %392, %394 : vector<8x128xf32>
    %396 = vector.extract_strided_slice %382 {offsets = [0, 0], sizes = [8, 1], strides = [1, 1]} : vector<8x8xf32> to vector<8x1xf32>
    %397 = vector.extract_strided_slice %395 {offsets = [0, 0], sizes = [1, 128], strides = [1, 1]} : vector<8x128xf32> to vector<1x128xf32>
    %398 = vector.broadcast %396 : vector<8x1xf32> to vector<8x128xf32>
    %399 = vector.broadcast %397 : vector<1x128xf32> to vector<8x128xf32>
    %400 = arith.mulf %398, %399 : vector<8x128xf32>
    %401 = vector.extract_strided_slice %382 {offsets = [0, 1], sizes = [8, 1], strides = [1, 1]} : vector<8x8xf32> to vector<8x1xf32>
    %402 = vector.extract_strided_slice %395 {offsets = [1, 0], sizes = [1, 128], strides = [1, 1]} : vector<8x128xf32> to vector<1x128xf32>
    %403 = vector.broadcast %401 : vector<8x1xf32> to vector<8x128xf32>
    %404 = vector.broadcast %402 : vector<1x128xf32> to vector<8x128xf32>
    %405 = arith.mulf %403, %404 : vector<8x128xf32>
    %406 = arith.addf %400, %405 : vector<8x128xf32>
    %407 = vector.extract_strided_slice %382 {offsets = [0, 2], sizes = [8, 1], strides = [1, 1]} : vector<8x8xf32> to vector<8x1xf32>
    %408 = vector.extract_strided_slice %395 {offsets = [2, 0], sizes = [1, 128], strides = [1, 1]} : vector<8x128xf32> to vector<1x128xf32>
    %409 = vector.broadcast %407 : vector<8x1xf32> to vector<8x128xf32>
    %410 = vector.broadcast %408 : vector<1x128xf32> to vector<8x128xf32>
    %411 = arith.mulf %409, %410 : vector<8x128xf32>
    %412 = arith.addf %406, %411 : vector<8x128xf32>
    %413 = vector.extract_strided_slice %382 {offsets = [0, 3], sizes = [8, 1], strides = [1, 1]} : vector<8x8xf32> to vector<8x1xf32>
    %414 = vector.extract_strided_slice %395 {offsets = [3, 0], sizes = [1, 128], strides = [1, 1]} : vector<8x128xf32> to vector<1x128xf32>
    %415 = vector.broadcast %413 : vector<8x1xf32> to vector<8x128xf32>
    %416 = vector.broadcast %414 : vector<1x128xf32> to vector<8x128xf32>
    %417 = arith.mulf %415, %416 : vector<8x128xf32>
    %418 = arith.addf %412, %417 : vector<8x128xf32>
    %419 = vector.extract_strided_slice %382 {offsets = [0, 4], sizes = [8, 1], strides = [1, 1]} : vector<8x8xf32> to vector<8x1xf32>
    %420 = vector.extract_strided_slice %395 {offsets = [4, 0], sizes = [1, 128], strides = [1, 1]} : vector<8x128xf32> to vector<1x128xf32>
    %421 = vector.broadcast %419 : vector<8x1xf32> to vector<8x128xf32>
    %422 = vector.broadcast %420 : vector<1x128xf32> to vector<8x128xf32>
    %423 = arith.mulf %421, %422 : vector<8x128xf32>
    %424 = arith.addf %418, %423 : vector<8x128xf32>
    %425 = vector.extract_strided_slice %382 {offsets = [0, 5], sizes = [8, 1], strides = [1, 1]} : vector<8x8xf32> to vector<8x1xf32>
    %426 = vector.extract_strided_slice %395 {offsets = [5, 0], sizes = [1, 128], strides = [1, 1]} : vector<8x128xf32> to vector<1x128xf32>
    %427 = vector.broadcast %425 : vector<8x1xf32> to vector<8x128xf32>
    %428 = vector.broadcast %426 : vector<1x128xf32> to vector<8x128xf32>
    %429 = arith.mulf %427, %428 : vector<8x128xf32>
    %430 = arith.addf %424, %429 : vector<8x128xf32>
    %431 = vector.extract_strided_slice %382 {offsets = [0, 6], sizes = [8, 1], strides = [1, 1]} : vector<8x8xf32> to vector<8x1xf32>
    %432 = vector.extract_strided_slice %395 {offsets = [6, 0], sizes = [1, 128], strides = [1, 1]} : vector<8x128xf32> to vector<1x128xf32>
    %433 = vector.broadcast %431 : vector<8x1xf32> to vector<8x128xf32>
    %434 = vector.broadcast %432 : vector<1x128xf32> to vector<8x128xf32>
    %435 = arith.mulf %433, %434 : vector<8x128xf32>
    %436 = arith.addf %430, %435 : vector<8x128xf32>
    %437 = vector.extract_strided_slice %382 {offsets = [0, 7], sizes = [8, 1], strides = [1, 1]} : vector<8x8xf32> to vector<8x1xf32>
    %438 = vector.extract_strided_slice %395 {offsets = [7, 0], sizes = [1, 128], strides = [1, 1]} : vector<8x128xf32> to vector<1x128xf32>
    %439 = vector.broadcast %437 : vector<8x1xf32> to vector<8x128xf32>
    %440 = vector.broadcast %438 : vector<1x128xf32> to vector<8x128xf32>
    %441 = arith.mulf %439, %440 : vector<8x128xf32>
    %442 = arith.addf %436, %441 : vector<8x128xf32>
    %443 = arith.addf %380, %442 : vector<8x128xf32>
    %c18 = arith.constant 18 : index
    %c0_69 = arith.constant 0 : index
    %c0_70 = arith.constant 0 : index
    %444 = vector.load %arg4[%c18, %c0_69, %c0_70] : memref<19x8x1xf32, #tpu.memory_space<vmem>>, vector<1x8x1xf32>
    %445 = vector.shape_cast %444 : vector<1x8x1xf32> to vector<8x1xf32>
    %446 = vector.broadcast %445 : vector<8x1xf32> to vector<8x128xf32>
    %447 = arith.addf %443, %446 : vector<8x128xf32>
    %c0_71 = arith.constant 0 : index
    %c0_72 = arith.constant 0 : index
    %c0_73 = arith.constant 0 : index
    %448 = vector.load %arg7[%c0_71, %c0_72, %c0_73] : memref<1x8x128xf32, #tpu.memory_space<vmem>>, vector<1x8x128xf32>
    %449 = vector.shape_cast %448 : vector<1x8x128xf32> to vector<8x128xf32>
    %450 = vector.shape_cast %447 : vector<8x128xf32> to vector<1x8x128xf32>
    tpu.vector_store %arg7[%c0_71, %c0_72, %c0_73], %450 {strides = array<i32>} : memref<1x8x128xf32, #tpu.memory_space<vmem>>, vector<1x8x128xf32>,
    return
  }
  func.func @transform_0(%arg0: i32, %arg1: i32) -> (i32, i32, i32) {
    %c0_i32 = arith.constant 0 : i32
    %c0_i32_0 = arith.constant 0 : i32
    return %arg0, %c0_i32, %arg1 : i32, i32, i32
  }
  func.func @transform_1(%arg0: i32, %arg1: i32) -> (i32, i32, i32) {
    %c0_i32 = arith.constant 0 : i32
    %c0_i32_0 = arith.constant 0 : i32
    return %arg0, %c0_i32, %arg1 : i32, i32, i32
  }
  func.func @transform_2(%arg0: i32, %arg1: i32) -> (i32, i32, i32) {
    %c0_i32 = arith.constant 0 : i32
    %c0_i32_0 = arith.constant 0 : i32
    %c0_i32_1 = arith.constant 0 : i32
    %c0_i32_2 = arith.constant 0 : i32
    return %c0_i32, %c0_i32_0, %c0_i32_1 : i32, i32, i32
  }
  func.func @transform_3(%arg0: i32, %arg1: i32) -> (i32, i32, i32) {
    %c0_i32 = arith.constant 0 : i32
    %c0_i32_0 = arith.constant 0 : i32
    %c0_i32_1 = arith.constant 0 : i32
    %c0_i32_2 = arith.constant 0 : i32
    return %c0_i32, %c0_i32_0, %c0_i32_1 : i32, i32, i32
  }
  func.func @transform_4(%arg0: i32, %arg1: i32) -> (i32, i32, i32) {
    %c0_i32 = arith.constant 0 : i32
    %c0_i32_0 = arith.constant 0 : i32
    %c0_i32_1 = arith.constant 0 : i32
    %c0_i32_2 = arith.constant 0 : i32
    return %c0_i32, %c0_i32_0, %c0_i32_1 : i32, i32, i32
  }
  func.func @transform_5(%arg0: i32, %arg1: i32) -> (i32, i32, i32) {
    %c0_i32 = arith.constant 0 : i32
    %c0_i32_0 = arith.constant 0 : i32
    return %arg0, %c0_i32, %arg1 : i32, i32, i32
  }
}

</mosaic_0001>

<llo_original>
// kernel: memory_block_forward.1
$region0: #{memory_block_forward.1}
  #allocation0 [shape = 'u32[]', space=smem, size = 0x4, offset = 0x4, fixed_abs, tag = 'smem constant byte address 0x4 - core index']
  #allocation1 [shape = 'u32[144,128]{1,0:T(1,128)}', space=vmem, size = 0x12000, scoped, tag = 'internal scratch']
  %s0 = inlined_call_operand.vmem [shape: f32[2,8,128], index: 0, kind: input, shape index: {}]
  %s1 = inlined_call_operand.vmem [shape: f32[2,8,128], index: 1, kind: input, shape index: {}]
  %s2 = inlined_call_operand.vmem [shape: f32[19,8,1], index: 2, kind: input, shape index: {}]
  %s3 = inlined_call_operand.vmem [shape: f32[4,8,8], index: 3, kind: input, shape index: {}]
  %s4 = inlined_call_operand.vmem [shape: f32[3,8,8], index: 4, kind: input, shape index: {}]
  %s5 = inlined_call_operand.vmem [shape: f32[2,8,128], index: 5, kind: output, shape index: {}]
  %s6 = sld [smem:[#allocation0]]
  $region53: #{memory_block_forward.1} parent=0
    _
  %s8 = ssub.s32 1, %s6
  %s9 = scalar_select 0, %s8, %s6
  loop: start=0, step=1, limit=4
  $region2: #{memory_block_forward.1} parent=0 // loop_pre_header
    _
  $region3: #{memory_block_forward.1} parent=0 // loop_header
    %s11 = sphi 0, %s15
    %p12 = scmp.ge.s32.totalorder %s11, 4
    %s18 = sphi 0, %s30
    %s19 = sphi 0, %s26
    %s20 = sphi 0, %s18
    %s21 = sphi 0, %s19
    %s22 = sphi 0, %s20
    %s23 = sphi 0, %s21
    %s35 = sphi 0, %s37
    %s38 = sphi 0, %s35
    %s39 = sphi 0, %s38
    %s55 = sphi 0, %s39
    %s63 = sphi 0, %s65
    %s66 = sphi 0, %s63
    %s67 = sphi 0, %s66
    %s83 = sphi 0, %s67
    %s87 = sphi 0, %s87
    %s89 = sphi 0, %s87
    %s90 = sphi 0, %s89
    %s104 = sphi 0, %s90
    %s108 = sphi 0, %s108
    %s110 = sphi 0, %s108
    %s111 = sphi 0, %s110
    %s125 = sphi 0, %s111
    %s129 = sphi 0, %s129
    %s131 = sphi 0, %s129
    %s132 = sphi 0, %s131
    %s146 = sphi 0, %s132
    %s154 = sphi 0, %s156
    %s157 = sphi 0, %s154
    %s158 = sphi 0, %s157
    %s174 = sphi 0, %s158
  $region4: #{memory_block_forward.1} parent=0 // loop_header_branch
    %14 = sbr.rel (%p12) target = $region8
  $region5: #{memory_block_forward.1} parent=0 // loop_body
    %s16 = ssub.s32 %s11, 1
    %s17 = ssub.s32 %s11, 2
    %s24 = sadd.s32 1, %s19
    %p25 = scmp.ge.s32.totalorder %s24, 1
    %s26 = scalar_select %p25, 0, %s24
    %s27 = sadd.s32 1, %s18
    %s28 = scalar_select %p25, %s27, %s18
    %p29 = scmp.ge.s32.totalorder %s28, 2
    %s30 = scalar_select %p29, 0, %s28
    %s31 = ssub.s32 %s18, %s30
    %s32 = ssub.s32 %s19, %s26
    %s33 = sor.u32 %s31, %s32
    %p34 = scmp.eq.s32.totalorder %s33, 0
    %s36 = sadd.s32 %s35, 1
    %s37 = scalar_select %p34, %s35, %s36
    %p40 = pneg %p34
    %p41 = scmp.eq.s32.totalorder %s11, 1
    %p42 = por %p40, %p41
    %p43 = scmp.ne.s32.totalorder %s35, %s38
    %p44 = scmp.eq.s32.totalorder %s11, 0
    %p45 = por %p43, %p44
    %p46 = scmp.ne.s32.totalorder %s35, %s38
    %p47 = scmp.eq.s32.totalorder %s16, 1
    %p48 = por %p46, %p47
    %p49 = scmp.ne.s32.totalorder %s38, %s39
    %p50 = scmp.eq.s32.totalorder %s16, 0
    %p51 = por %p49, %p50
    %p52 = scmp.ne.s32.totalorder %s38, %s39
    %p53 = scmp.eq.s32.totalorder %s17, 1
    %p54 = por %p52, %p53
    %p56 = scmp.ne.s32.totalorder %s39, %s55
    %p57 = scmp.eq.s32.totalorder %s17, 0
    %p58 = por %p56, %p57
    %s59 = ssub.s32 %s18, %s30
    %s60 = ssub.s32 %s19, %s26
    %s61 = sor.u32 %s59, %s60
    %p62 = scmp.eq.s32.totalorder %s61, 0
    %s64 = sadd.s32 %s63, 1
    %s65 = scalar_select %p62, %s63, %s64
    %p68 = pneg %p62
    %p69 = scmp.eq.s32.totalorder %s11, 1
    %p70 = por %p68, %p69
    %p71 = scmp.ne.s32.totalorder %s63, %s66
    %p72 = scmp.eq.s32.totalorder %s11, 0
    %p73 = por %p71, %p72
    %p74 = scmp.ne.s32.totalorder %s63, %s66
    %p75 = scmp.eq.s32.totalorder %s16, 1
    %p76 = por %p74, %p75
    %p77 = scmp.ne.s32.totalorder %s66, %s67
    %p78 = scmp.eq.s32.totalorder %s16, 0
    %p79 = por %p77, %p78
    %p80 = scmp.ne.s32.totalorder %s66, %s67
    %p81 = scmp.eq.s32.totalorder %s17, 1
    %p82 = por %p80, %p81
    %p84 = scmp.ne.s32.totalorder %s67, %s83
    %p85 = scmp.eq.s32.totalorder %s17, 0
    %p86 = por %p84, %p85
    %s88 = sadd.s32 %s87, 1
    %p91 = scmp.eq.s32.totalorder %s11, 1
    %p92 = scmp.ne.s32.totalorder %s87, %s89
    %p93 = scmp.eq.s32.totalorder %s11, 0
    %p94 = por %p92, %p93
    %p95 = scmp.ne.s32.totalorder %s87, %s89
    %p96 = scmp.eq.s32.totalorder %s16, 1
    %p97 = por %p95, %p96
    %p98 = scmp.ne.s32.totalorder %s89, %s90
    %p99 = scmp.eq.s32.totalorder %s16, 0
    %p100 = por %p98, %p99
    %p101 = scmp.ne.s32.totalorder %s89, %s90
    %p102 = scmp.eq.s32.totalorder %s17, 1
    %p103 = por %p101, %p102
    %p105 = scmp.ne.s32.totalorder %s90, %s104
    %p106 = scmp.eq.s32.totalorder %s17, 0
    %p107 = por %p105, %p106
    %s109 = sadd.s32 %s108, 1
    %p112 = scmp.eq.s32.totalorder %s11, 1
    %p113 = scmp.ne.s32.totalorder %s108, %s110
    %p114 = scmp.eq.s32.totalorder %s11, 0
    %p115 = por %p113, %p114
    %p116 = scmp.ne.s32.totalorder %s108, %s110
    %p117 = scmp.eq.s32.totalorder %s16, 1
    %p118 = por %p116, %p117
    %p119 = scmp.ne.s32.totalorder %s110, %s111
    %p120 = scmp.eq.s32.totalorder %s16, 0
    %p121 = por %p119, %p120
    %p122 = scmp.ne.s32.totalorder %s110, %s111
    %p123 = scmp.eq.s32.totalorder %s17, 1
    %p124 = por %p122, %p123
    %p126 = scmp.ne.s32.totalorder %s111, %s125
    %p127 = scmp.eq.s32.totalorder %s17, 0
    %p128 = por %p126, %p127
    %s130 = sadd.s32 %s129, 1
    %p133 = scmp.eq.s32.totalorder %s11, 1
    %p134 = scmp.ne.s32.totalorder %s129, %s131
    %p135 = scmp.eq.s32.totalorder %s11, 0
    %p136 = por %p134, %p135
    %p137 = scmp.ne.s32.totalorder %s129, %s131
    %p138 = scmp.eq.s32.totalorder %s16, 1
    %p139 = por %p137, %p138
    %p140 = scmp.ne.s32.totalorder %s131, %s132
    %p141 = scmp.eq.s32.totalorder %s16, 0
    %p142 = por %p140, %p141
    %p143 = scmp.ne.s32.totalorder %s131, %s132
    %p144 = scmp.eq.s32.totalorder %s17, 1
    %p145 = por %p143, %p144
    %p147 = scmp.ne.s32.totalorder %s132, %s146
    %p148 = scmp.eq.s32.totalorder %s17, 0
    %p149 = por %p147, %p148
    %s150 = ssub.s32 %s18, %s30
    %s151 = ssub.s32 %s19, %s26
    %s152 = sor.u32 %s150, %s151
    %p153 = scmp.eq.s32.totalorder %s152, 0
    %s155 = sadd.s32 %s154, 1
    %s156 = scalar_select %p153, %s154, %s155
    %p159 = pneg %p153
    %p160 = scmp.eq.s32.totalorder %s11, 1
    %p161 = por %p159, %p160
    %p162 = scmp.ne.s32.totalorder %s154, %s157
    %p163 = scmp.eq.s32.totalorder %s11, 0
    %p164 = por %p162, %p163
    %p165 = scmp.ne.s32.totalorder %s154, %s157
    %p166 = scmp.eq.s32.totalorder %s16, 1
    %p167 = por %p165, %p166
    %p168 = scmp.ne.s32.totalorder %s157, %s158
    %p169 = scmp.eq.s32.totalorder %s16, 0
    %p170 = por %p168, %p169
    %p171 = scmp.ne.s32.totalorder %s157, %s158
    %p172 = scmp.eq.s32.totalorder %s17, 1
    %p173 = por %p171, %p172
    %p175 = scmp.ne.s32.totalorder %s158, %s174
    %p176 = scmp.eq.s32.totalorder %s17, 0
    %p177 = por %p175, %p176
    %p178 = scmp.le.s32.totalorder 1, %s11
    %p179 = scmp.lt.s32.totalorder %s11, 3
    %p180 = pnand %p178, %p179
    %p181 = pneg %p180
    // Predicated region
    $region9: #{memory_block_forward.1} parent=5 // pred_check
      _
    $region10: #{memory_block_forward.1} parent=5 // pred_check_branch
      %183 = sbr.rel (%p180) target = $region12
    $region11: #{memory_block_forward.1} parent=5 // pred_region
      %s184 = ssub.s32 %s11, 1
      // Predicated region
      $region13: #{memory_block_forward.1} parent=11 // pred_check
        %p185 = pneg %p100
      $region14: #{memory_block_forward.1} parent=11 // pred_check_branch
        %187 = sbr.rel (%p185) target = $region16
      $region15: #{memory_block_forward.1} parent=11 // pred_region
        _
      $region16: #{memory_block_forward.1} parent=11 // pred_fallthru
        _
      // Predicated region
      $region17: #{memory_block_forward.1} parent=11 // pred_check
        %p188 = pneg %p121
      $region18: #{memory_block_forward.1} parent=11 // pred_check_branch
        %190 = sbr.rel (%p188) target = $region20
      $region19: #{memory_block_forward.1} parent=11 // pred_region
        _
      $region20: #{memory_block_forward.1} parent=11 // pred_fallthru
        _
      // Predicated region
      $region21: #{memory_block_forward.1} parent=11 // pred_check
        %p191 = pneg %p142
      $region22: #{memory_block_forward.1} parent=11 // pred_check_branch
        %193 = sbr.rel (%p191) target = $region24
      $region23: #{memory_block_forward.1} parent=11 // pred_region
        _
      $region24: #{memory_block_forward.1} parent=11 // pred_fallthru
        _
    $region12: #{memory_block_forward.1} parent=5 // pred_fallthru
      _
    %p194 = scmp.lt.s32.totalorder %s11, 2
    // Predicated region
    $region25: #{memory_block_forward.1} parent=5 // pred_check
      %p195 = pneg %p194
    $region26: #{memory_block_forward.1} parent=5 // pred_check_branch
      %197 = sbr.rel (%p195) target = $region28
    $region27: #{memory_block_forward.1} parent=5 // pred_region
      // Predicated region
      $region29: #{memory_block_forward.1} parent=27 // pred_check
        %p198 = pneg %p45
      $region30: #{memory_block_forward.1} parent=27 // pred_check_branch
        %200 = sbr.rel (%p198) target = $region32
      $region31: #{memory_block_forward.1} parent=27 // pred_region
        %p201 = scmp.lt.s32.totalorder %s18, 1
        %s202 = scalar_select %p201, %s18, 1
        %p203 = scmp.lt.s32.totalorder %s19, 0
        %s204 = scalar_select %p203, %s19, 0
        %s205 = sadd.s32 %s204, %s202
        %s206 = smul.addr %s205, 8
        %s207 = scalar_lea.vmem %s0, %s206
      $region32: #{memory_block_forward.1} parent=27 // pred_fallthru
        _
      // Predicated region
      $region33: #{memory_block_forward.1} parent=27 // pred_check
        %p208 = pneg %p73
      $region34: #{memory_block_forward.1} parent=27 // pred_check_branch
        %210 = sbr.rel (%p208) target = $region36
      $region35: #{memory_block_forward.1} parent=27 // pred_region
        %p211 = scmp.lt.s32.totalorder %s18, 1
        %s212 = scalar_select %p211, %s18, 1
        %p213 = scmp.lt.s32.totalorder %s19, 0
        %s214 = scalar_select %p213, %s19, 0
        %s215 = sadd.s32 %s214, %s212
        %s216 = smul.addr %s215, 8
        %s217 = scalar_lea.vmem %s1, %s216
      $region36: #{memory_block_forward.1} parent=27 // pred_fallthru
        _
    $region28: #{memory_block_forward.1} parent=5 // pred_fallthru
      _
    %p218 = scmp.le.s32.totalorder 1, %s11
    %p219 = scmp.lt.s32.totalorder %s11, 3
    %p220 = pnand %p218, %p219
    %p221 = pneg %p220
    // Predicated region
    $region37: #{memory_block_forward.1} parent=5 // pred_check
      _
    $region38: #{memory_block_forward.1} parent=5 // pred_check_branch
      %223 = sbr.rel (%p220) target = $region40
    $region39: #{memory_block_forward.1} parent=5 // pred_region
      %s224 = ssub.s32 %s11, 1
      %p225 = scmp.lt.s32.totalorder %s20, 1
      %s226 = scalar_select %p225, %s20, 1
      %p227 = scmp.lt.s32.totalorder %s21, 0
      %s228 = scalar_select %p227, %s21, 0
      %s229 = sadd.s32 %s228, %s226
      %s230 = smul.addr %s229, 8
      %s231 = scalar_lea.vmem %s0, %s230
      %p232 = pneg %p51
      %p233 = pneg %p48
      %p234 = scmp.lt.s32.totalorder %s20, 1
      %s235 = scalar_select %p234, %s20, 1
      %p236 = scmp.lt.s32.totalorder %s21, 0
      %s237 = scalar_select %p236, %s21, 0
      %s238 = sadd.s32 %s237, %s235
      %s239 = smul.addr %s238, 8
      %s240 = scalar_lea.vmem %s1, %s239
      %p241 = pneg %p79
      %p242 = pneg %p76
      %p243 = pneg %p100
      %p244 = pneg %p97
      %p245 = pneg %p121
      %p246 = pneg %p118
      %p247 = pneg %p142
      %p248 = pneg %p139
      %p249 = pneg %p170
      %p250 = pneg %p167
      %p251 = scmp.lt.s32.totalorder %s20, 1
      %s252 = scalar_select %p251, %s20, 1
      %p253 = scmp.lt.s32.totalorder %s21, 0
      %s254 = scalar_select %p253, %s21, 0
      %s255 = sadd.s32 %s254, %s252
      %s256 = smul.addr %s255, 8
      %s257 = scalar_lea.vmem %s5, %s256
      %p258 = scmp.lt.s32.totalorder %s20, 1
      %s259 = scalar_select %p258, %s20, 1
      %p260 = scmp.lt.s32.totalorder %s21, 0
      %s261 = scalar_select %p260, %s21, 0
      %s262 = sadd.s32 %s261, %s259
      %s263 = smul.addr %s262, 8
      %s264 = scalar_lea.vmem %s0, %s263
      %p265 = scmp.lt.s32.totalorder %s20, 1
      %s266 = scalar_select %p265, %s20, 1
      %p267 = scmp.lt.s32.totalorder %s21, 0
      %s268 = scalar_select %p267, %s21, 0
      %s269 = sadd.s32 %s268, %s266
      %s270 = smul.addr %s269, 8
      %s271 = scalar_lea.vmem %s1, %s270
      %p272 = scmp.lt.s32.totalorder %s20, 1
      %s273 = scalar_select %p272, %s20, 1
      %p274 = scmp.lt.s32.totalorder %s21, 0
      %s275 = scalar_select %p274, %s21, 0
      %s276 = sadd.s32 %s275, %s273
      %s277 = smul.addr %s276, 8
      %s278 = scalar_lea.vmem %s5, %s277
      %v279 = vld [vmem:[%s264] sm:$0xff]
      %v280 = vld [vmem:[%s3] sm:$0xff]
      %v281 = vld [vmem:[%s2] sm:$0xff]
      %283 = vset.pattern.permute.xlu0 0
      %284 = vperm.xlu0 %283, %v281
      %v285 = vpop.permute.xlu0 %284
      %v287 = vmul.f32 %v279, %v285
      %s288 = scalar_lea.vmem %s2, 8
      %v289 = vld [vmem:[%s288] sm:$0xff]
      %291 = vset.pattern.permute.xlu0 0
      %292 = vperm.xlu0 %291, %v289
      %v293 = vpop.permute.xlu0 %292
      %v295 = vadd.f32 %v287, %v293
      %v296 = vmul.f32 %v295, 0.01
      %v297 = vmax.f32 %v295, %v296
      %299 = vset.pattern.permute.xlu0 0
      %300 = vperm.xlu0 %299, %v280
      %v301 = vpop.permute.xlu0 %300
      %v303 = vlaneseq
      %v304 = vshrl.u32 %v303, 7
      %v305 = vsub.s32 0, %v304
      %v306 = vrot.slane %v297, %v305
      %v307 = vmul.f32 %v301, %v306
      %308 = vset.pattern.permute.xlu0 1
      %309 = vperm.xlu0 %308, %v280
      %v310 = vpop.permute.xlu0 %309
      %v312 = vlaneseq
      %v313 = vshrl.u32 %v312, 7
      %v314 = vsub.s32 1, %v313
      %v315 = vrot.slane %v297, %v314
      %v316 = vmul.f32 %v310, %v315
      %v317 = vadd.f32 %v307, %v316
      %318 = vset.pattern.permute.xlu0 2
      %319 = vperm.xlu0 %318, %v280
      %v320 = vpop.permute.xlu0 %319
      %v322 = vlaneseq
      %v323 = vshrl.u32 %v322, 7
      %v324 = vsub.s32 2, %v323
      %v325 = vrot.slane %v297, %v324
      %v326 = vmul.f32 %v320, %v325
      %v327 = vadd.f32 %v317, %v326
      %328 = vset.pattern.permute.xlu0 3
      %329 = vperm.xlu0 %328, %v280
      %v330 = vpop.permute.xlu0 %329
      %v332 = vlaneseq
      %v333 = vshrl.u32 %v332, 7
      %v334 = vsub.s32 3, %v333
      %v335 = vrot.slane %v297, %v334
      %v336 = vmul.f32 %v330, %v335
      %v337 = vadd.f32 %v327, %v336
      %338 = vset.pattern.permute.xlu0 4
      %339 = vperm.xlu0 %338, %v280
      %v340 = vpop.permute.xlu0 %339
      %v342 = vlaneseq
      %v343 = vshrl.u32 %v342, 7
      %v344 = vsub.s32 4, %v343
      %v345 = vrot.slane %v297, %v344
      %v346 = vmul.f32 %v340, %v345
      %v347 = vadd.f32 %v337, %v346
      %348 = vset.pattern.permute.xlu0 5
      %349 = vperm.xlu0 %348, %v280
      %v350 = vpop.permute.xlu0 %349
      %v352 = vlaneseq
      %v353 = vshrl.u32 %v352, 7
      %v354 = vsub.s32 5, %v353
      %v355 = vrot.slane %v297, %v354
      %v356 = vmul.f32 %v350, %v355
      %v357 = vadd.f32 %v347, %v356
      %358 = vset.pattern.permute.xlu0 6
      %359 = vperm.xlu0 %358, %v280
      %v360 = vpop.permute.xlu0 %359
      %v362 = vlaneseq
      %v363 = vshrl.u32 %v362, 7
      %v364 = vsub.s32 6, %v363
      %v365 = vrot.slane %v297, %v364
      %v366 = vmul.f32 %v360, %v365
      %v367 = vadd.f32 %v357, %v366
      %368 = vset.pattern.permute.xlu0 7
      %369 = vperm.xlu0 %368, %v280
      %v370 = vpop.permute.xlu0 %369
      %v372 = vlaneseq
      %v373 = vshrl.u32 %v372, 7
      %v374 = vsub.s32 7, %v373
      %v375 = vrot.slane %v297, %v374
      %v376 = vmul.f32 %v370, %v375
      %v377 = vadd.f32 %v367, %v376
      %s378 = scalar_lea.vmem %s2, 16
      %v379 = vld [vmem:[%s378] sm:$0xff]
      %381 = vset.pattern.permute.xlu0 0
      %382 = vperm.xlu0 %381, %v379
      %v383 = vpop.permute.xlu0 %382
      %v385 = vadd.f32 %v377, %v383
      %s386 = scalar_lea.vmem %s3, 8
      %v387 = vld [vmem:[%s386] sm:$0xff]
      %s388 = scalar_lea.vmem %s2, 24
      %v389 = vld [vmem:[%s388] sm:$0xff]
      %391 = vset.pattern.permute.xlu0 0
      %392 = vperm.xlu0 %391, %v389
      %v393 = vpop.permute.xlu0 %392
      %v395 = vmul.f32 %v385, %v393
      %s396 = scalar_lea.vmem %s2, 32
      %v397 = vld [vmem:[%s396] sm:$0xff]
      %399 = vset.pattern.permute.xlu0 0
      %400 = vperm.xlu0 %399, %v397
      %v401 = vpop.permute.xlu0 %400
      %v403 = vadd.f32 %v395, %v401
      %v404 = vmul.f32 %v403, 0.01
      %v405 = vmax.f32 %v403, %v404
      %407 = vset.pattern.permute.xlu0 0
      %408 = vperm.xlu0 %407, %v387
      %v409 = vpop.permute.xlu0 %408
      %v411 = vlaneseq
      %v412 = vshrl.u32 %v411, 7
      %v413 = vsub.s32 0, %v412
      %v414 = vrot.slane %v405, %v413
      %v415 = vmul.f32 %v409, %v414
      %416 = vset.pattern.permute.xlu0 1
      %417 = vperm.xlu0 %416, %v387
      %v418 = vpop.permute.xlu0 %417
      %v420 = vlaneseq
      %v421 = vshrl.u32 %v420, 7
      %v422 = vsub.s32 1, %v421
      %v423 = vrot.slane %v405, %v422
      %v424 = vmul.f32 %v418, %v423
      %v425 = vadd.f32 %v415, %v424
      %426 = vset.pattern.permute.xlu0 2
      %427 = vperm.xlu0 %426, %v387
      %v428 = vpop.permute.xlu0 %427
      %v430 = vlaneseq
      %v431 = vshrl.u32 %v430, 7
      %v432 = vsub.s32 2, %v431
      %v433 = vrot.slane %v405, %v432
      %v434 = vmul.f32 %v428, %v433
      %v435 = vadd.f32 %v425, %v434
      %436 = vset.pattern.permute.xlu0 3
      %437 = vperm.xlu0 %436, %v387
      %v438 = vpop.permute.xlu0 %437
      %v440 = vlaneseq
      %v441 = vshrl.u32 %v440, 7
      %v442 = vsub.s32 3, %v441
      %v443 = vrot.slane %v405, %v442
      %v444 = vmul.f32 %v438, %v443
      %v445 = vadd.f32 %v435, %v444
      %446 = vset.pattern.permute.xlu0 4
      %447 = vperm.xlu0 %446, %v387
      %v448 = vpop.permute.xlu0 %447
      %v450 = vlaneseq
      %v451 = vshrl.u32 %v450, 7
      %v452 = vsub.s32 4, %v451
      %v453 = vrot.slane %v405, %v452
      %v454 = vmul.f32 %v448, %v453
      %v455 = vadd.f32 %v445, %v454
      %456 = vset.pattern.permute.xlu0 5
      %457 = vperm.xlu0 %456, %v387
      %v458 = vpop.permute.xlu0 %457
      %v460 = vlaneseq
      %v461 = vshrl.u32 %v460, 7
      %v462 = vsub.s32 5, %v461
      %v463 = vrot.slane %v405, %v462
      %v464 = vmul.f32 %v458, %v463
      %v465 = vadd.f32 %v455, %v464
      %466 = vset.pattern.permute.xlu0 6
      %467 = vperm.xlu0 %466, %v387
      %v468 = vpop.permute.xlu0 %467
      %v470 = vlaneseq
      %v471 = vshrl.u32 %v470, 7
      %v472 = vsub.s32 6, %v471
      %v473 = vrot.slane %v405, %v472
      %v474 = vmul.f32 %v468, %v473
      %v475 = vadd.f32 %v465, %v474
      %476 = vset.pattern.permute.xlu0 7
      %477 = vperm.xlu0 %476, %v387
      %v478 = vpop.permute.xlu0 %477
      %v480 = vlaneseq
      %v481 = vshrl.u32 %v480, 7
      %v482 = vsub.s32 7, %v481
      %v483 = vrot.slane %v405, %v482
      %v484 = vmul.f32 %v478, %v483
      %v485 = vadd.f32 %v475, %v484
      %s486 = scalar_lea.vmem %s2, 40
      %v487 = vld [vmem:[%s486] sm:$0xff]
      %489 = vset.pattern.permute.xlu0 0
      %490 = vperm.xlu0 %489, %v487
      %v491 = vpop.permute.xlu0 %490
      %v493 = vadd.f32 %v485, %v491
      %v494 = vadd.f32 %v493, %v279
      %v495 = vld [vmem:[%s4] sm:$0xff]
      %s496 = scalar_lea.vmem %s2, 96
      %v497 = vld [vmem:[%s496] sm:$0xff]
      %499 = vset.pattern.permute.xlu0 0
      %500 = vperm.xlu0 %499, %v497
      %v501 = vpop.permute.xlu0 %500
      %v503 = vmul.f32 %v494, %v501
      %s504 = scalar_lea.vmem %s2, 104
      %v505 = vld [vmem:[%s504] sm:$0xff]
      %507 = vset.pattern.permute.xlu0 0
      %508 = vperm.xlu0 %507, %v505
      %v509 = vpop.permute.xlu0 %508
      %v511 = vadd.f32 %v503, %v509
      %v512 = vmul.f32 %v511, 0.01
      %v513 = vmax.f32 %v511, %v512
      %515 = vset.pattern.permute.xlu0 0
      %516 = vperm.xlu0 %515, %v495
      %v517 = vpop.permute.xlu0 %516
      %v519 = vlaneseq
      %v520 = vshrl.u32 %v519, 7
      %v521 = vsub.s32 0, %v520
      %v522 = vrot.slane %v513, %v521
      %v523 = vmul.f32 %v517, %v522
      %524 = vset.pattern.permute.xlu0 1
      %525 = vperm.xlu0 %524, %v495
      %v526 = vpop.permute.xlu0 %525
      %v528 = vlaneseq
      %v529 = vshrl.u32 %v528, 7
      %v530 = vsub.s32 1, %v529
      %v531 = vrot.slane %v513, %v530
      %v532 = vmul.f32 %v526, %v531
      %v533 = vadd.f32 %v523, %v532
      %534 = vset.pattern.permute.xlu0 2
      %535 = vperm.xlu0 %534, %v495
      %v536 = vpop.permute.xlu0 %535
      %v538 = vlaneseq
      %v539 = vshrl.u32 %v538, 7
      %v540 = vsub.s32 2, %v539
      %v541 = vrot.slane %v513, %v540
      %v542 = vmul.f32 %v536, %v541
      %v543 = vadd.f32 %v533, %v542
      %544 = vset.pattern.permute.xlu0 3
      %545 = vperm.xlu0 %544, %v495
      %v546 = vpop.permute.xlu0 %545
      %v548 = vlaneseq
      %v549 = vshrl.u32 %v548, 7
      %v550 = vsub.s32 3, %v549
      %v551 = vrot.slane %v513, %v550
      %v552 = vmul.f32 %v546, %v551
      %v553 = vadd.f32 %v543, %v552
      %554 = vset.pattern.permute.xlu0 4
      %555 = vperm.xlu0 %554, %v495
      %v556 = vpop.permute.xlu0 %555
      %v558 = vlaneseq
      %v559 = vshrl.u32 %v558, 7
      %v560 = vsub.s32 4, %v559
      %v561 = vrot.slane %v513, %v560
      %v562 = vmul.f32 %v556, %v561
      %v563 = vadd.f32 %v553, %v562
      %564 = vset.pattern.permute.xlu0 5
      %565 = vperm.xlu0 %564, %v495
      %v566 = vpop.permute.xlu0 %565
      %v568 = vlaneseq
      %v569 = vshrl.u32 %v568, 7
      %v570 = vsub.s32 5, %v569
      %v571 = vrot.slane %v513, %v570
      %v572 = vmul.f32 %v566, %v571
      %v573 = vadd.f32 %v563, %v572
      %574 = vset.pattern.permute.xlu0 6
      %575 = vperm.xlu0 %574, %v495
      %v576 = vpop.permute.xlu0 %575
      %v578 = vlaneseq
      %v579 = vshrl.u32 %v578, 7
      %v580 = vsub.s32 6, %v579
      %v581 = vrot.slane %v513, %v580
      %v582 = vmul.f32 %v576, %v581
      %v583 = vadd.f32 %v573, %v582
      %584 = vset.pattern.permute.xlu0 7
      %585 = vperm.xlu0 %584, %v495
      %v586 = vpop.permute.xlu0 %585
      %v588 = vlaneseq
      %v589 = vshrl.u32 %v588, 7
      %v590 = vsub.s32 7, %v589
      %v591 = vrot.slane %v513, %v590
      %v592 = vmul.f32 %v586, %v591
      %v593 = vadd.f32 %v583, %v592
      %s594 = scalar_lea.vmem %s3, 16
      %v595 = vld [vmem:[%s594] sm:$0xff]
      %s596 = scalar_lea.vmem %s2, 48
      %v597 = vld [vmem:[%s596] sm:$0xff]
      %599 = vset.pattern.permute.xlu0 0
      %600 = vperm.xlu0 %599, %v597
      %v601 = vpop.permute.xlu0 %600
      %v603 = vmul.f32 %v494, %v601
      %s604 = scalar_lea.vmem %s2, 56
      %v605 = vld [vmem:[%s604] sm:$0xff]
      %607 = vset.pattern.permute.xlu0 0
      %608 = vperm.xlu0 %607, %v605
      %v609 = vpop.permute.xlu0 %608
      %v611 = vadd.f32 %v603, %v609
      %v612 = vmul.f32 %v611, 0.01
      %v613 = vmax.f32 %v611, %v612
      %615 = vset.pattern.permute.xlu0 0
      %616 = vperm.xlu0 %615, %v595
      %v617 = vpop.permute.xlu0 %616
      %v619 = vlaneseq
      %v620 = vshrl.u32 %v619, 7
      %v621 = vsub.s32 0, %v620
      %v622 = vrot.slane %v613, %v621
      %v623 = vmul.f32 %v617, %v622
      %624 = vset.pattern.permute.xlu0 1
      %625 = vperm.xlu0 %624, %v595
      %v626 = vpop.permute.xlu0 %625
      %v628 = vlaneseq
      %v629 = vshrl.u32 %v628, 7
      %v630 = vsub.s32 1, %v629
      %v631 = vrot.slane %v613, %v630
      %v632 = vmul.f32 %v626, %v631
      %v633 = vadd.f32 %v623, %v632
      %634 = vset.pattern.permute.xlu0 2
      %635 = vperm.xlu0 %634, %v595
      %v636 = vpop.permute.xlu0 %635
      %v638 = vlaneseq
      %v639 = vshrl.u32 %v638, 7
      %v640 = vsub.s32 2, %v639
      %v641 = vrot.slane %v613, %v640
      %v642 = vmul.f32 %v636, %v641
      %v643 = vadd.f32 %v633, %v642
      %644 = vset.pattern.permute.xlu0 3
      %645 = vperm.xlu0 %644, %v595
      %v646 = vpop.permute.xlu0 %645
      %v648 = vlaneseq
      %v649 = vshrl.u32 %v648, 7
      %v650 = vsub.s32 3, %v649
      %v651 = vrot.slane %v613, %v650
      %v652 = vmul.f32 %v646, %v651
      %v653 = vadd.f32 %v643, %v652
      %654 = vset.pattern.permute.xlu0 4
      %655 = vperm.xlu0 %654, %v595
      %v656 = vpop.permute.xlu0 %655
      %v658 = vlaneseq
      %v659 = vshrl.u32 %v658, 7
      %v660 = vsub.s32 4, %v659
      %v661 = vrot.slane %v613, %v660
      %v662 = vmul.f32 %v656, %v661
      %v663 = vadd.f32 %v653, %v662
      %664 = vset.pattern.permute.xlu0 5
      %665 = vperm.xlu0 %664, %v595
      %v666 = vpop.permute.xlu0 %665
      %v668 = vlaneseq
      %v669 = vshrl.u32 %v668, 7
      %v670 = vsub.s32 5, %v669
      %v671 = vrot.slane %v613, %v670
      %v672 = vmul.f32 %v666, %v671
      %v673 = vadd.f32 %v663, %v672
      %674 = vset.pattern.permute.xlu0 6
      %675 = vperm.xlu0 %674, %v595
      %v676 = vpop.permute.xlu0 %675
      %v678 = vlaneseq
      %v679 = vshrl.u32 %v678, 7
      %v680 = vsub.s32 6, %v679
      %v681 = vrot.slane %v613, %v680
      %v682 = vmul.f32 %v676, %v681
      %v683 = vadd.f32 %v673, %v682
      %684 = vset.pattern.permute.xlu0 7
      %685 = vperm.xlu0 %684, %v595
      %v686 = vpop.permute.xlu0 %685
      %v688 = vlaneseq
      %v689 = vshrl.u32 %v688, 7
      %v690 = vsub.s32 7, %v689
      %v691 = vrot.slane %v613, %v690
      %v692 = vmul.f32 %v686, %v691
      %v693 = vadd.f32 %v683, %v692
      %s694 = scalar_lea.vmem %s2, 64
      %v695 = vld [vmem:[%s694] sm:$0xff]
      %697 = vset.pattern.permute.xlu0 0
      %698 = vperm.xlu0 %697, %v695
      %v699 = vpop.permute.xlu0 %698
      %v701 = vadd.f32 %v693, %v699
      %s702 = scalar_lea.vmem %s3, 24
      %v703 = vld [vmem:[%s702] sm:$0xff]
      %s704 = scalar_lea.vmem %s2, 72
      %v705 = vld [vmem:[%s704] sm:$0xff]
      %707 = vset.pattern.permute.xlu0 0
      %708 = vperm.xlu0 %707, %v705
      %v709 = vpop.permute.xlu0 %708
      %v711 = vmul.f32 %v701, %v709
      %s712 = scalar_lea.vmem %s2, 80
      %v713 = vld [vmem:[%s712] sm:$0xff]
      %715 = vset.pattern.permute.xlu0 0
      %716 = vperm.xlu0 %715, %v713
      %v717 = vpop.permute.xlu0 %716
      %v719 = vadd.f32 %v711, %v717
      %v720 = vmul.f32 %v719, 0.01
      %v721 = vmax.f32 %v719, %v720
      %723 = vset.pattern.permute.xlu0 0
      %724 = vperm.xlu0 %723, %v703
      %v725 = vpop.permute.xlu0 %724
      %v727 = vlaneseq
      %v728 = vshrl.u32 %v727, 7
      %v729 = vsub.s32 0, %v728
      %v730 = vrot.slane %v721, %v729
      %v731 = vmul.f32 %v725, %v730
      %732 = vset.pattern.permute.xlu0 1
      %733 = vperm.xlu0 %732, %v703
      %v734 = vpop.permute.xlu0 %733
      %v736 = vlaneseq
      %v737 = vshrl.u32 %v736, 7
      %v738 = vsub.s32 1, %v737
      %v739 = vrot.slane %v721, %v738
      %v740 = vmul.f32 %v734, %v739
      %v741 = vadd.f32 %v731, %v740
      %742 = vset.pattern.permute.xlu0 2
      %743 = vperm.xlu0 %742, %v703
      %v744 = vpop.permute.xlu0 %743
      %v746 = vlaneseq
      %v747 = vshrl.u32 %v746, 7
      %v748 = vsub.s32 2, %v747
      %v749 = vrot.slane %v721, %v748
      %v750 = vmul.f32 %v744, %v749
      %v751 = vadd.f32 %v741, %v750
      %752 = vset.pattern.permute.xlu0 3
      %753 = vperm.xlu0 %752, %v703
      %v754 = vpop.permute.xlu0 %753
      %v756 = vlaneseq
      %v757 = vshrl.u32 %v756, 7
      %v758 = vsub.s32 3, %v757
      %v759 = vrot.slane %v721, %v758
      %v760 = vmul.f32 %v754, %v759
      %v761 = vadd.f32 %v751, %v760
      %762 = vset.pattern.permute.xlu0 4
      %763 = vperm.xlu0 %762, %v703
      %v764 = vpop.permute.xlu0 %763
      %v766 = vlaneseq
      %v767 = vshrl.u32 %v766, 7
      %v768 = vsub.s32 4, %v767
      %v769 = vrot.slane %v721, %v768
      %v770 = vmul.f32 %v764, %v769
      %v771 = vadd.f32 %v761, %v770
      %772 = vset.pattern.permute.xlu0 5
      %773 = vperm.xlu0 %772, %v703
      %v774 = vpop.permute.xlu0 %773
      %v776 = vlaneseq
      %v777 = vshrl.u32 %v776, 7
      %v778 = vsub.s32 5, %v777
      %v779 = vrot.slane %v721, %v778
      %v780 = vmul.f32 %v774, %v779
      %v781 = vadd.f32 %v771, %v780
      %782 = vset.pattern.permute.xlu0 6
      %783 = vperm.xlu0 %782, %v703
      %v784 = vpop.permute.xlu0 %783
      %v786 = vlaneseq
      %v787 = vshrl.u32 %v786, 7
      %v788 = vsub.s32 6, %v787
      %v789 = vrot.slane %v721, %v788
      %v790 = vmul.f32 %v784, %v789
      %v791 = vadd.f32 %v781, %v790
      %792 = vset.pattern.permute.xlu0 7
      %793 = vperm.xlu0 %792, %v703
      %v794 = vpop.permute.xlu0 %793
      %v796 = vlaneseq
      %v797 = vshrl.u32 %v796, 7
      %v798 = vsub.s32 7, %v797
      %v799 = vrot.slane %v721, %v798
      %v800 = vmul.f32 %v794, %v799
      %v801 = vadd.f32 %v791, %v800
      %s802 = scalar_lea.vmem %s2, 88
      %v803 = vld [vmem:[%s802] sm:$0xff]
      %805 = vset.pattern.permute.xlu0 0
      %806 = vperm.xlu0 %805, %v803
      %v807 = vpop.permute.xlu0 %806
      %v809 = vadd.f32 %v801, %v807
      %v810 = vadd.f32 %v809, %v494
      %s811 = scalar_lea.vmem %s4, 8
      %v812 = vld [vmem:[%s811] sm:$0xff]
      %s813 = scalar_lea.vmem %s2, 112
      %v814 = vld [vmem:[%s813] sm:$0xff]
      %816 = vset.pattern.permute.xlu0 0
      %817 = vperm.xlu0 %816, %v814
      %v818 = vpop.permute.xlu0 %817
      %v820 = vmul.f32 %v810, %v818
      %s821 = scalar_lea.vmem %s2, 120
      %v822 = vld [vmem:[%s821] sm:$0xff]
      %824 = vset.pattern.permute.xlu0 0
      %825 = vperm.xlu0 %824, %v822
      %v826 = vpop.permute.xlu0 %825
      %v828 = vadd.f32 %v820, %v826
      %v829 = vmul.f32 %v828, 0.01
      %v830 = vmax.f32 %v828, %v829
      %832 = vset.pattern.permute.xlu0 0
      %833 = vperm.xlu0 %832, %v812
      %v834 = vpop.permute.xlu0 %833
      %v836 = vlaneseq
      %v837 = vshrl.u32 %v836, 7
      %v838 = vsub.s32 0, %v837
      %v839 = vrot.slane %v830, %v838
      %v840 = vmul.f32 %v834, %v839
      %841 = vset.pattern.permute.xlu0 1
      %842 = vperm.xlu0 %841, %v812
      %v843 = vpop.permute.xlu0 %842
      %v845 = vlaneseq
      %v846 = vshrl.u32 %v845, 7
      %v847 = vsub.s32 1, %v846
      %v848 = vrot.slane %v830, %v847
      %v849 = vmul.f32 %v843, %v848
      %v850 = vadd.f32 %v840, %v849
      %851 = vset.pattern.permute.xlu0 2
      %852 = vperm.xlu0 %851, %v812
      %v853 = vpop.permute.xlu0 %852
      %v855 = vlaneseq
      %v856 = vshrl.u32 %v855, 7
      %v857 = vsub.s32 2, %v856
      %v858 = vrot.slane %v830, %v857
      %v859 = vmul.f32 %v853, %v858
      %v860 = vadd.f32 %v850, %v859
      %861 = vset.pattern.permute.xlu0 3
      %862 = vperm.xlu0 %861, %v812
      %v863 = vpop.permute.xlu0 %862
      %v865 = vlaneseq
      %v866 = vshrl.u32 %v865, 7
      %v867 = vsub.s32 3, %v866
      %v868 = vrot.slane %v830, %v867
      %v869 = vmul.f32 %v863, %v868
      %v870 = vadd.f32 %v860, %v869
      %871 = vset.pattern.permute.xlu0 4
      %872 = vperm.xlu0 %871, %v812
      %v873 = vpop.permute.xlu0 %872
      %v875 = vlaneseq
      %v876 = vshrl.u32 %v875, 7
      %v877 = vsub.s32 4, %v876
      %v878 = vrot.slane %v830, %v877
      %v879 = vmul.f32 %v873, %v878
      %v880 = vadd.f32 %v870, %v879
      %881 = vset.pattern.permute.xlu0 5
      %882 = vperm.xlu0 %881, %v812
      %v883 = vpop.permute.xlu0 %882
      %v885 = vlaneseq
      %v886 = vshrl.u32 %v885, 7
      %v887 = vsub.s32 5, %v886
      %v888 = vrot.slane %v830, %v887
      %v889 = vmul.f32 %v883, %v888
      %v890 = vadd.f32 %v880, %v889
      %891 = vset.pattern.permute.xlu0 6
      %892 = vperm.xlu0 %891, %v812
      %v893 = vpop.permute.xlu0 %892
      %v895 = vlaneseq
      %v896 = vshrl.u32 %v895, 7
      %v897 = vsub.s32 6, %v896
      %v898 = vrot.slane %v830, %v897
      %v899 = vmul.f32 %v893, %v898
      %v900 = vadd.f32 %v890, %v899
      %901 = vset.pattern.permute.xlu0 7
      %902 = vperm.xlu0 %901, %v812
      %v903 = vpop.permute.xlu0 %902
      %v905 = vlaneseq
      %v906 = vshrl.u32 %v905, 7
      %v907 = vsub.s32 7, %v906
      %v908 = vrot.slane %v830, %v907
      %v909 = vmul.f32 %v903, %v908
      %v910 = vadd.f32 %v900, %v909
      %v911 = vadd.f32 %v593, %v910
      %s912 = scalar_lea.vmem %s4, 16
      %v913 = vld [vmem:[%s912] sm:$0xff]
      %v914 = vld [vmem:[%s271] sm:$0xff]
      %s915 = scalar_lea.vmem %s2, 128
      %v916 = vld [vmem:[%s915] sm:$0xff]
      %918 = vset.pattern.permute.xlu0 0
      %919 = vperm.xlu0 %918, %v916
      %v920 = vpop.permute.xlu0 %919
      %v922 = vmul.f32 %v914, %v920
      %s923 = scalar_lea.vmem %s2, 136
      %v924 = vld [vmem:[%s923] sm:$0xff]
      %926 = vset.pattern.permute.xlu0 0
      %927 = vperm.xlu0 %926, %v924
      %v928 = vpop.permute.xlu0 %927
      %v930 = vadd.f32 %v922, %v928
      %v931 = vmul.f32 %v930, 0.01
      %v932 = vmax.f32 %v930, %v931
      %934 = vset.pattern.permute.xlu0 0
      %935 = vperm.xlu0 %934, %v913
      %v936 = vpop.permute.xlu0 %935
      %v938 = vlaneseq
      %v939 = vshrl.u32 %v938, 7
      %v940 = vsub.s32 0, %v939
      %v941 = vrot.slane %v932, %v940
      %v942 = vmul.f32 %v936, %v941
      %943 = vset.pattern.permute.xlu0 1
      %944 = vperm.xlu0 %943, %v913
      %v945 = vpop.permute.xlu0 %944
      %v947 = vlaneseq
      %v948 = vshrl.u32 %v947, 7
      %v949 = vsub.s32 1, %v948
      %v950 = vrot.slane %v932, %v949
      %v951 = vmul.f32 %v945, %v950
      %v952 = vadd.f32 %v942, %v951
      %953 = vset.pattern.permute.xlu0 2
      %954 = vperm.xlu0 %953, %v913
      %v955 = vpop.permute.xlu0 %954
      %v957 = vlaneseq
      %v958 = vshrl.u32 %v957, 7
      %v959 = vsub.s32 2, %v958
      %v960 = vrot.slane %v932, %v959
      %v961 = vmul.f32 %v955, %v960
      %v962 = vadd.f32 %v952, %v961
      %963 = vset.pattern.permute.xlu0 3
      %964 = vperm.xlu0 %963, %v913
      %v965 = vpop.permute.xlu0 %964
      %v967 = vlaneseq
      %v968 = vshrl.u32 %v967, 7
      %v969 = vsub.s32 3, %v968
      %v970 = vrot.slane %v932, %v969
      %v971 = vmul.f32 %v965, %v970
      %v972 = vadd.f32 %v962, %v971
      %973 = vset.pattern.permute.xlu0 4
      %974 = vperm.xlu0 %973, %v913
      %v975 = vpop.permute.xlu0 %974
      %v977 = vlaneseq
      %v978 = vshrl.u32 %v977, 7
      %v979 = vsub.s32 4, %v978
      %v980 = vrot.slane %v932, %v979
      %v981 = vmul.f32 %v975, %v980
      %v982 = vadd.f32 %v972, %v981
      %983 = vset.pattern.permute.xlu0 5
      %984 = vperm.xlu0 %983, %v913
      %v985 = vpop.permute.xlu0 %984
      %v987 = vlaneseq
      %v988 = vshrl.u32 %v987, 7
      %v989 = vsub.s32 5, %v988
      %v990 = vrot.slane %v932, %v989
      %v991 = vmul.f32 %v985, %v990
      %v992 = vadd.f32 %v982, %v991
      %993 = vset.pattern.permute.xlu0 6
      %994 = vperm.xlu0 %993, %v913
      %v995 = vpop.permute.xlu0 %994
      %v997 = vlaneseq
      %v998 = vshrl.u32 %v997, 7
      %v999 = vsub.s32 6, %v998
      %v1000 = vrot.slane %v932, %v999
      %v1001 = vmul.f32 %v995, %v1000
      %v1002 = vadd.f32 %v992, %v1001
      %1003 = vset.pattern.permute.xlu0 7
      %1004 = vperm.xlu0 %1003, %v913
      %v1005 = vpop.permute.xlu0 %1004
      %v1007 = vlaneseq
      %v1008 = vshrl.u32 %v1007, 7
      %v1009 = vsub.s32 7, %v1008
      %v1010 = vrot.slane %v932, %v1009
      %v1011 = vmul.f32 %v1005, %v1010
      %v1012 = vadd.f32 %v1002, %v1011
      %v1013 = vadd.f32 %v911, %v1012
      %s1014 = scalar_lea.vmem %s2, 144
      %v1015 = vld [vmem:[%s1014] sm:$0xff]
      %1017 = vset.pattern.permute.xlu0 0
      %1018 = vperm.xlu0 %1017, %v1015
      %v1019 = vpop.permute.xlu0 %1018
      %v1021 = vadd.f32 %v1013, %v1019
      %1022 = vst [vmem:[%s278] sm:$0xff] %v1021
      %p1023 = scmp.lt.s32.totalorder %s20, 1
      %s1024 = scalar_select %p1023, %s20, 1
      %p1025 = scmp.lt.s32.totalorder %s21, 0
      %s1026 = scalar_select %p1025, %s21, 0
      %s1027 = sadd.s32 %s1026, %s1024
      %s1028 = smul.addr %s1027, 8
      %s1029 = scalar_lea.vmem %s5, %s1028
      // Predicated region
      $region41: #{memory_block_forward.1} parent=39 // pred_check
        %p1030 = pneg %p167
      $region42: #{memory_block_forward.1} parent=39 // pred_check_branch
        %1032 = sbr.rel (%p1030) target = $region44
      $region43: #{memory_block_forward.1} parent=39 // pred_region
        _
      $region44: #{memory_block_forward.1} parent=39 // pred_fallthru
        _
    $region40: #{memory_block_forward.1} parent=5 // pred_fallthru
      _
    %p1033 = scmp.le.s32.totalorder 2, %s11
    // Predicated region
    $region45: #{memory_block_forward.1} parent=5 // pred_check
      %p1034 = pneg %p1033
    $region46: #{memory_block_forward.1} parent=5 // pred_check_branch
      %1036 = sbr.rel (%p1034) target = $region48
    $region47: #{memory_block_forward.1} parent=5 // pred_region
      %s1037 = ssub.s32 %s11, 2
      // Predicated region
      $region49: #{memory_block_forward.1} parent=47 // pred_check
        %p1038 = pneg %p173
      $region50: #{memory_block_forward.1} parent=47 // pred_check_branch
        %1040 = sbr.rel (%p1038) target = $region52
      $region51: #{memory_block_forward.1} parent=47 // pred_region
        %p1041 = scmp.lt.s32.totalorder %s22, 1
        %s1042 = scalar_select %p1041, %s22, 1
        %p1043 = scmp.lt.s32.totalorder %s23, 0
        %s1044 = scalar_select %p1043, %s23, 0
        %s1045 = sadd.s32 %s1044, %s1042
        %s1046 = smul.addr %s1045, 8
        %s1047 = scalar_lea.vmem %s5, %s1046
      $region52: #{memory_block_forward.1} parent=47 // pred_fallthru
        _
    $region48: #{memory_block_forward.1} parent=5 // pred_fallthru
      _
  $region6: #{memory_block_forward.1} parent=0 // loop_footer
    %s15 = sadd.s32 1, %s11
  $region7: #{memory_block_forward.1} parent=0 // loop_footer_branch
    %10 = sbr.rel target = $region3
  $region8: #{memory_block_forward.1} parent=0 // loop_exit
    _

</llo_original>
